<compile_context>
chip_gen: v7x
topology: tpu7x:2x2x1
jax: 0.10.0
libtpu: 0.0.40
codegen_flags: <defaults>
</compile_context>

<pallas_src>
import jax
import jax.numpy as jnp
from jax.experimental import pallas as pl
from jax.experimental.pallas import tpu as pltpu

EMB_DIM = 1200
ACT_DIM = 2
HID_DIM = 512


def critic_kernel(emb_ref, act_ref, w1a_ref, w1b_ref, b1_ref, w2_ref, b2_ref,
                  o_ref):
    # emb: [tm, 1200] f32 (cast to bf16 in VMEM -> MXU stream)
    # act: [tm, 2]    f32 (cast to bf16, K=2 MXU accumulate)
    # w1a: [1200, 512] bf16   w1b: [2, 512] bf16   b1: [1, 512] f32
    # w2 : [1, 512] bf16 (lane-dense row)           b2: [1] f32 in SMEM
    # o  : [tm, 1] f32
    emb_bf = emb_ref[...].astype(jnp.bfloat16)
    act_bf = act_ref[...].astype(jnp.bfloat16)

    h = jnp.dot(emb_bf, w1a_ref[...], preferred_element_type=jnp.float32)
    h = h + jnp.dot(act_bf, w1b_ref[...], preferred_element_type=jnp.float32)
    h = jnp.maximum(h + b1_ref[...], 0.0)                     # ReLU, f32

    # fc2: bf16 lane-dense multiply, f32-accumulated cross-lane reduce.
    prod = h.astype(jnp.bfloat16) * w2_ref[...]
    out = jnp.sum(prod, axis=-1, keepdims=True, dtype=jnp.float32) + b2_ref[0]
    o_ref[...] = out.astype(o_ref.dtype)


def prepare_params(w1, b1, w2, b2):
    """One-time re-layout of PyTorch-style params ([in,out] weights, [1,out] biases).

    w1 [1202,512] -> (bf16 [1200,512] MXU stream, bf16 [2,512] K=2 MXU slice)
    w2 [512,1]    -> lane-dense bf16 [1,512]
    b2            -> f32 [1] (SMEM scalar)
    """
    w1a = w1[:EMB_DIM, :].astype(jnp.bfloat16)
    w1b = w1[EMB_DIM:, :].astype(jnp.bfloat16)
    b1r = b1.reshape(1, -1).astype(jnp.float32)
    w2r = w2.reshape(1, -1).astype(jnp.bfloat16)
    b2r = b2.reshape(-1).astype(jnp.float32)
    return w1a, w1b, b1r, w2r, b2r


def _choose_tm(batch):
    """Batch tile: small batches -> one padded 8-row tile; large batches -> the
    biggest tile in [128, 512] that still leaves ~8 grid steps (>=4 per
    TensorCore on v7x) so DMA/compute overlap and per-step overhead amortize."""
    if batch <= 128:
        return max(8, ((batch + 7) // 8) * 8)
    tm = (batch // 8) // 128 * 128
    return int(min(512, max(128, tm)))


def critic_forward(embedding, action, w1a, w1b, b1, w2_row, b2):
    B, emb_dim = embedding.shape
    act_dim = action.shape[1]
    hid = w1a.shape[1]

    tm = _choose_tm(B)
    n_blocks = pl.cdiv(B, tm)
    Bp = n_blocks * tm

    emb = embedding.astype(jnp.float32)
    act = action.astype(jnp.float32)
    if Bp != B:  # zero-pad the batch; pad rows are sliced off below
        emb = jnp.pad(emb, ((0, Bp - B), (0, 0)))
        act = jnp.pad(act, ((0, Bp - B), (0, 0)))

    out = pl.pallas_call(
        critic_kernel,
        out_shape=jax.ShapeDtypeStruct((Bp, 1), jnp.float32),
        grid=(n_blocks,),
        in_specs=[
            pl.BlockSpec((tm, emb_dim), lambda i: (i, 0)),       # emb tile (f32)
            pl.BlockSpec((tm, act_dim), lambda i: (i, 0)),       # action tile
            pl.BlockSpec((emb_dim, hid), lambda i: (0, 0)),      # w1a (VMEM-resident)
            pl.BlockSpec((act_dim, hid), lambda i: (0, 0)),      # w1b
            pl.BlockSpec((1, hid), lambda i: (0, 0)),            # b1
            pl.BlockSpec((1, hid), lambda i: (0, 0)),            # w2 row
            pl.BlockSpec(memory_space=pltpu.MemorySpace.SMEM),   # b2 scalar
        ],
        out_specs=pl.BlockSpec((tm, 1), lambda i: (i, 0)),
        compiler_params=pltpu.CompilerParams(
            dimension_semantics=("parallel",)),
    )(emb, act, w1a, w1b, b1, w2_row, b2)
    return out[:B]


def init_params(key):
    # Deterministic synthetic init (PyTorch-style uniform ranges), f32 master copy.
    k1, k2, k3, k4 = jax.random.split(key, 4)
    in1, out1 = EMB_DIM + ACT_DIM, HID_DIM
    in2, out2 = HID_DIM, 1
    bound1 = 1.0 / (in1 ** 0.5)
    bound2 = 1.0 / (in2 ** 0.5)
    w1 = jax.random.uniform(k1, (in1, out1), jnp.float32, -bound1, bound1)
    b1 = jax.random.uniform(k2, (1, out1), jnp.float32, -bound1, bound1)
    w2 = jax.random.uniform(k3, (in2, out2), jnp.float32, -bound2, bound2)
    b2 = jax.random.uniform(k4, (1, out2), jnp.float32, -bound2, bound2)
    return w1, b1, w2, b2


def _reference(embedding, action, w1a, w1b, b1, w2_row, b2):
    # Pure-JAX reference mirroring the kernel's bf16 streams / f32 accumulation.
    emb = embedding.astype(jnp.bfloat16).astype(jnp.float32)
    act = action.astype(jnp.bfloat16).astype(jnp.float32)
    h = emb @ w1a.astype(jnp.float32) + act @ w1b.astype(jnp.float32) + b1
    h = jnp.maximum(h, 0.0)
    hb = h.astype(jnp.bfloat16).astype(jnp.float32)
    return hb @ w2_row.astype(jnp.float32).T + b2[0]


if __name__ == "__main__":
    key = jax.random.PRNGKey(0)
    kp, ke, ka, ke2, ka2 = jax.random.split(key, 5)

    w1, b1, w2, b2 = init_params(kp)
    w1a, w1b, b1r, w2r, b2r = prepare_params(w1, b1, w2, b2)

    # Small-batch path (B=2 -> one padded 8-row tile).
    B = 2
    embedding = jax.random.normal(ke, (B, EMB_DIM), jnp.float32)
    action = jax.random.normal(ka, (B, ACT_DIM), jnp.float32)
    out = jax.block_until_ready(
        critic_forward(embedding, action, w1a, w1b, b1r, w2r, b2r))
    ref = _reference(embedding, action, w1a, w1b, b1r, w2r, b2r)
    assert out.shape == (B, 1)
    assert jnp.allclose(out, ref, atol=2e-2, rtol=2e-2)

    # Also check against the exact f32 PyTorch-equivalent math (bf16 error only).
    x = jnp.concatenate([embedding, action], axis=1)
    ref_f32 = jnp.maximum(x @ w1 + b1, 0.0) @ w2 + b2
    assert jnp.allclose(out, ref_f32, atol=5e-2, rtol=5e-2)

    # Gridded, non-divisible batch (B=300 -> tm=128, grid=(3,), zero-padded tail).
    B2 = 300
    embedding2 = jax.random.normal(ke2, (B2, EMB_DIM), jnp.float32)
    action2 = jax.random.normal(ka2, (B2, ACT_DIM), jnp.float32)
    out2 = jax.block_until_ready(
        critic_forward(embedding2, action2, w1a, w1b, b1r, w2r, b2r))
    ref2 = _reference(embedding2, action2, w1a, w1b, b1r, w2r, b2r)
    assert out2.shape == (B2, 1)
    assert jnp.allclose(out2, ref2, atol=2e-2, rtol=2e-2)

    print("KERNEL_OK")
</pallas_src>

<mosaic_0001>
module attributes {stable_mosaic.version = 11 : i64} {
  func.func @critic_kernel(%arg0: i32, %arg1: memref<8x1200xf32, #tpu.memory_space<vmem>>, %arg2: memref<8x2xf32, #tpu.memory_space<vmem>>, %arg3: memref<1200x512xbf16, #tpu.memory_space<vmem>>, %arg4: memref<2x512xbf16, #tpu.memory_space<vmem>>, %arg5: memref<1x512xf32, #tpu.memory_space<vmem>>, %arg6: memref<1x512xbf16, #tpu.memory_space<vmem>>, %arg7: memref<1xf32, #tpu.memory_space<smem>>, %arg8: memref<8x1xf32, #tpu.memory_space<vmem>>) attributes {dimension_semantics = [#tpu.dimension_semantics<parallel>], iteration_bounds = array<i64: 1>, scalar_prefetch = 0 : i64, scratch_operands = 0 : i64, tpu.core_type = #tpu.core_type<tc>, window_params = [{transform_indices = @transform_0, window_bounds = array<i64: 8, 1200>}, {transform_indices = @transform_1, window_bounds = array<i64: 8, 2>}, {pipeline_mode = #tpu.pipeline_mode<synchronous>, transform_indices = @transform_2, window_bounds = array<i64: 1200, 512>}, {pipeline_mode = #tpu.pipeline_mode<synchronous>, transform_indices = @transform_3, window_bounds = array<i64: 2, 512>}, {pipeline_mode = #tpu.pipeline_mode<synchronous>, transform_indices = @transform_4, window_bounds = array<i64: 1, 512>}, {pipeline_mode = #tpu.pipeline_mode<synchronous>, transform_indices = @transform_5, window_bounds = array<i64: 1, 512>}, {transform_indices = @transform_6, window_bounds = array<i64: 1>}, {transform_indices = @transform_7, window_bounds = array<i64: 8, 1>}]} {
    %c0 = arith.constant 0 : index
    %c0_0 = arith.constant 0 : index
    %0 = vector.load %arg1[%c0, %c0_0] : memref<8x1200xf32, #tpu.memory_space<vmem>>, vector<8x1200xf32>
    %1 = arith.truncf %0 : vector<8x1200xf32> to vector<8x1200xbf16>
    %c0_1 = arith.constant 0 : index
    %c0_2 = arith.constant 0 : index
    %2 = vector.load %arg2[%c0_1, %c0_2] : memref<8x2xf32, #tpu.memory_space<vmem>>, vector<8x2xf32>
    %3 = arith.truncf %2 : vector<8x2xf32> to vector<8x2xbf16>
    %c0_3 = arith.constant 0 : index
    %c0_4 = arith.constant 0 : index
    %4 = vector.load %arg3[%c0_3, %c0_4] : memref<1200x512xbf16, #tpu.memory_space<vmem>>, vector<1200x512xbf16>
    %cst = arith.constant dense<0.000000e+00> : vector<8x512xf32>
    %5 = tpu.matmul %1, %4, %cst {dimension_numbers = #tpu.dot_dimension_numbers<[1], [0], [0], [1], [0, 0, 1, 1], [], []>} : vector<8x1200xbf16>, vector<1200x512xbf16>, vector<8x512xf32> -> vector<8x512xf32>
    %c0_5 = arith.constant 0 : index
    %c0_6 = arith.constant 0 : index
    %6 = vector.load %arg4[%c0_5, %c0_6] : memref<2x512xbf16, #tpu.memory_space<vmem>>, vector<2x512xbf16>
    %cst_7 = arith.constant dense<0.000000e+00> : vector<8x512xf32>
    %7 = tpu.matmul %3, %6, %cst_7 {dimension_numbers = #tpu.dot_dimension_numbers<[1], [0], [0], [1], [0, 0, 1, 1], [], []>} : vector<8x2xbf16>, vector<2x512xbf16>, vector<8x512xf32> -> vector<8x512xf32>
    %8 = arith.addf %5, %7 : vector<8x512xf32>
    %c0_8 = arith.constant 0 : index
    %c0_9 = arith.constant 0 : index
    %9 = vector.load %arg5[%c0_8, %c0_9] : memref<1x512xf32, #tpu.memory_space<vmem>>, vector<1x512xf32>
    %10 = vector.broadcast %9 : vector<1x512xf32> to vector<8x512xf32>
    %11 = arith.addf %8, %10 : vector<8x512xf32>
    %cst_10 = arith.constant 0.000000e+00 : f32
    %12 = vector.broadcast %cst_10 : f32 to vector<8x512xf32>
    %13 = arith.maximumf %11, %12 : vector<8x512xf32>
    %14 = arith.truncf %13 : vector<8x512xf32> to vector<8x512xbf16>
    %c0_11 = arith.constant 0 : index
    %c0_12 = arith.constant 0 : index
    %15 = vector.load %arg6[%c0_11, %c0_12] : memref<1x512xbf16, #tpu.memory_space<vmem>>, vector<1x512xbf16>
    %16 = vector.broadcast %15 : vector<1x512xbf16> to vector<8x512xbf16>
    %17 = arith.mulf %14, %16 : vector<8x512xbf16>
    %18 = arith.extf %17 : vector<8x512xbf16> to vector<8x512xf32>
    %cst_13 = arith.constant dense<0.000000e+00> : vector<8xf32>
    %19 = vector.multi_reduction <add>, %18, %cst_13 [1] : vector<8x512xf32> to vector<8xf32>
    %20 = vector.shape_cast %19 : vector<8xf32> to vector<8x1xf32>
    %c0_14 = arith.constant 0 : index
    %21 = memref.load %arg7[%c0_14] : memref<1xf32, #tpu.memory_space<smem>>
    %22 = vector.broadcast %21 : f32 to vector<8x1xf32>
    %23 = arith.addf %20, %22 : vector<8x1xf32>
    %c0_15 = arith.constant 0 : index
    %c0_16 = arith.constant 0 : index
    %24 = vector.load %arg8[%c0_15, %c0_16] : memref<8x1xf32, #tpu.memory_space<vmem>>, vector<8x1xf32>
    tpu.vector_store %arg8[%c0_15, %c0_16], %23 {strides = array<i32>} : memref<8x1xf32, #tpu.memory_space<vmem>>, vector<8x1xf32>,
    return
  }
  func.func @transform_0(%arg0: i32) -> (i32, i32) {
    %c0_i32 = arith.constant 0 : i32
    %c0_i32_0 = arith.constant 0 : i32
    return %arg0, %c0_i32 : i32, i32
  }
  func.func @transform_1(%arg0: i32) -> (i32, i32) {
    %c0_i32 = arith.constant 0 : i32
    %c0_i32_0 = arith.constant 0 : i32
    return %arg0, %c0_i32 : i32, i32
  }
  func.func @transform_2(%arg0: i32) -> (i32, i32) {
    %c0_i32 = arith.constant 0 : i32
    %c0_i32_0 = arith.constant 0 : i32
    %c0_i32_1 = arith.constant 0 : i32
    return %c0_i32, %c0_i32_0 : i32, i32
  }
  func.func @transform_3(%arg0: i32) -> (i32, i32) {
    %c0_i32 = arith.constant 0 : i32
    %c0_i32_0 = arith.constant 0 : i32
    %c0_i32_1 = arith.constant 0 : i32
    return %c0_i32, %c0_i32_0 : i32, i32
  }
  func.func @transform_4(%arg0: i32) -> (i32, i32) {
    %c0_i32 = arith.constant 0 : i32
    %c0_i32_0 = arith.constant 0 : i32
    %c0_i32_1 = arith.constant 0 : i32
    return %c0_i32, %c0_i32_0 : i32, i32
  }
  func.func @transform_5(%arg0: i32) -> (i32, i32) {
    %c0_i32 = arith.constant 0 : i32
    %c0_i32_0 = arith.constant 0 : i32
    %c0_i32_1 = arith.constant 0 : i32
    return %c0_i32, %c0_i32_0 : i32, i32
  }
  func.func @transform_6(%arg0: i32) -> i32 {
    %c0_i32 = arith.constant 0 : i32
    %c0_i32_0 = arith.constant 0 : i32
    return %c0_i32 : i32
  }
  func.func @transform_7(%arg0: i32) -> (i32, i32) {
    %c0_i32 = arith.constant 0 : i32
    %c0_i32_0 = arith.constant 0 : i32
    return %arg0, %c0_i32 : i32, i32
  }
}

</mosaic_0001>

<llo_original>
// kernel: tpu_custom_call.1
$region0: #{tpu_custom_call.1}
  #allocation0 [shape = 'u32[]', space=smem, size = 0x4, offset = 0x4, fixed_abs, tag = 'smem constant byte address 0x4 - core index']
  #allocation1 [shape = 'u32[144,128]{1,0:T(1,128)}', space=vmem, size = 0x12000, scoped, tag = 'internal scratch']
  #allocation2 [shape = 'f32[1]{0:T(128)S(6)}', space=smem, size = 0x200, scoped, tag = 'scoped memory for tpu_custom_call.1']
  %s0 = inlined_call_operand.hbm [shape: f32[8,1200], index: 0, kind: input, shape index: {}]
  %s1 = inlined_call_operand.vmem [shape: f32[8,2], index: 1, kind: input, shape index: {}]
  %s2 = inlined_call_operand.hbm [shape: bf16[1200,512], index: 2, kind: input, shape index: {}]
  %s3 = inlined_call_operand.hbm [shape: bf16[2,512], index: 3, kind: input, shape index: {}]
  %s4 = inlined_call_operand.hbm [shape: f32[1,512], index: 4, kind: input, shape index: {}]
  %s5 = inlined_call_operand.hbm [shape: bf16[1,512], index: 5, kind: input, shape index: {}]
  %s6 = inlined_call_operand.<no memory space> [shape: f32[1], index: 6, kind: input, shape index: {}]
  %s7 = inlined_call_operand.vmem [shape: f32[8,1], index: 7, kind: output, shape index: {}]
  %s8 = sld [smem:[#allocation0]]
  $region58: #{tpu_custom_call.1} parent=0
    _
  %s10 = ssub.s32 1, %s8
  %s11 = scalar_select 0, %s10, %s8
  %12 = sst [smem:[#allocation2]] %s6
  $region1: #{tpu_custom_call.1} parent=0
    #allocation3 [shape = 'u8[40960]{0}', space=vmem, size = 0xa000, scoped, tag = 'input window, operand 0, single buffered']
    #allocation4 [shape = 's32[1]{0}', space=sflag, size = 0x4, scoped, tag = 'scoped memory for tpu_custom_call.1']
    #allocation5 [shape = 'u8[1228800]{0}', space=vmem, size = 0x12c000, scoped, tag = 'input window, operand 2, single buffered']
    #allocation6 [shape = 's32[1]{0}', space=sflag, size = 0x4, scoped, tag = 'scoped memory for tpu_custom_call.1']
    #allocation7 [shape = 'u8[2048]{0}', space=vmem, size = 0x800, scoped, tag = 'input window, operand 3, single buffered']
    #allocation8 [shape = 'u8[2048]{0}', space=vmem, size = 0x800, scoped, tag = 'input window, operand 4, single buffered']
    #allocation9 [shape = 's32[1]{0}', space=sflag, size = 0x4, scoped, tag = 'scoped memory for tpu_custom_call.1']
    #allocation10 [shape = 'u8[2048]{0}', space=vmem, size = 0x800, scoped, tag = 'input window, operand 5, single buffered']
    %13 = vsyncpa [#allocation4], 0
    %14 = vsyncpa [#allocation6], 0
    %15 = vsyncpa [#allocation9], 0
    // Predicated region
    $region2: #{tpu_custom_call.1} parent=1 // pred_check
      _
    $region3: #{tpu_custom_call.1} parent=1 // pred_check_branch
      %17 = sbr.rel (0) target = $region5
    $region4: #{tpu_custom_call.1} parent=1 // pred_region
      %s19 = ssub.s32 1280, 1280
      %20 = vsyncadd [#allocation4], %s19
      %s22 = sshll.u32 [#allocation3], 4
      %s23 = int_to_ptr.vmem [resolvable:$true] %s22
      %25 = dma.hbm_to_vmem [thread:$0]  %s0, 1280, %s23, [#allocation4]
    $region5: #{tpu_custom_call.1} parent=1 // pred_fallthru
      _
    // Predicated region
    $region6: #{tpu_custom_call.1} parent=1 // pred_check
      _
    $region7: #{tpu_custom_call.1} parent=1 // pred_check_branch
      %27 = sbr.rel (0) target = $region9
    $region8: #{tpu_custom_call.1} parent=1 // pred_region
      _
    $region9: #{tpu_custom_call.1} parent=1 // pred_fallthru
      _
    // Predicated region
    $region10: #{tpu_custom_call.1} parent=1 // pred_check
      _
    $region11: #{tpu_custom_call.1} parent=1 // pred_check_branch
      %29 = sbr.rel (0) target = $region13
    $region12: #{tpu_custom_call.1} parent=1 // pred_region
      %s31 = ssub.s32 38400, 38400
      %32 = vsyncadd [#allocation6], %s31
      %s33 = sshll.u32 [#allocation5], 4
      %s34 = int_to_ptr.vmem [resolvable:$true] %s33
      %39 = dma.hbm_to_vmem [thread:$0]  %s2, 38400, %s34, [#allocation6], 256, 256, 16
    $region13: #{tpu_custom_call.1} parent=1 // pred_fallthru
      _
    // Predicated region
    $region14: #{tpu_custom_call.1} parent=1 // pred_check
      _
    $region15: #{tpu_custom_call.1} parent=1 // pred_check_branch
      %41 = sbr.rel (0) target = $region17
    $region16: #{tpu_custom_call.1} parent=1 // pred_region
      %s43 = ssub.s32 64, 64
      %44 = vsyncadd [#allocation6], %s43
      %s46 = sshll.u32 [#allocation7], 4
      %s47 = int_to_ptr.vmem [resolvable:$true] %s46
      %49 = dma.hbm_to_vmem [thread:$0]  %s3, 64, %s47, [#allocation6]
    $region17: #{tpu_custom_call.1} parent=1 // pred_fallthru
      _
    // Predicated region
    $region18: #{tpu_custom_call.1} parent=1 // pred_check
      _
    $region19: #{tpu_custom_call.1} parent=1 // pred_check_branch
      %51 = sbr.rel (0) target = $region21
    $region20: #{tpu_custom_call.1} parent=1 // pred_region
      %s53 = ssub.s32 64, 64
      %54 = vsyncadd [#allocation9], %s53
      %s56 = sshll.u32 [#allocation8], 4
      %s57 = int_to_ptr.vmem [resolvable:$true] %s56
      %59 = dma.hbm_to_vmem [thread:$0]  %s4, 64, %s57, [#allocation9]
    $region21: #{tpu_custom_call.1} parent=1 // pred_fallthru
      _
    // Predicated region
    $region22: #{tpu_custom_call.1} parent=1 // pred_check
      _
    $region23: #{tpu_custom_call.1} parent=1 // pred_check_branch
      %61 = sbr.rel (0) target = $region25
    $region24: #{tpu_custom_call.1} parent=1 // pred_region
      %s63 = ssub.s32 64, 64
      %64 = vsyncadd [#allocation9], %s63
      %s66 = sshll.u32 [#allocation10], 4
      %s67 = int_to_ptr.vmem [resolvable:$true] %s66
      %69 = dma.hbm_to_vmem [thread:$0]  %s5, 64, %s67, [#allocation9]
    $region25: #{tpu_custom_call.1} parent=1 // pred_fallthru
      _
    // Predicated region
    $region26: #{tpu_custom_call.1} parent=1 // pred_check
      _
    $region27: #{tpu_custom_call.1} parent=1 // pred_check_branch
      %71 = sbr.rel (0) target = $region29
    $region28: #{tpu_custom_call.1} parent=1 // pred_region
      _
    $region29: #{tpu_custom_call.1} parent=1 // pred_fallthru
      _
    // Predicated region
    $region30: #{tpu_custom_call.1} parent=1 // pred_check
      _
    $region31: #{tpu_custom_call.1} parent=1 // pred_check_branch
      %73 = sbr.rel (0) target = $region33
    $region32: #{tpu_custom_call.1} parent=1 // pred_region
      %74 = dma.done [#allocation4], 1280
    $region33: #{tpu_custom_call.1} parent=1 // pred_fallthru
      _
    // Predicated region
    $region34: #{tpu_custom_call.1} parent=1 // pred_check
      _
    $region35: #{tpu_custom_call.1} parent=1 // pred_check_branch
      %76 = sbr.rel (0) target = $region37
    $region36: #{tpu_custom_call.1} parent=1 // pred_region
      %77 = dma.done [#allocation6], 38400
    $region37: #{tpu_custom_call.1} parent=1 // pred_fallthru
      _
    // Predicated region
    $region38: #{tpu_custom_call.1} parent=1 // pred_check
      _
    $region39: #{tpu_custom_call.1} parent=1 // pred_check_branch
      %79 = sbr.rel (0) target = $region41
    $region40: #{tpu_custom_call.1} parent=1 // pred_region
      %80 = dma.done [#allocation6], 64
    $region41: #{tpu_custom_call.1} parent=1 // pred_fallthru
      _
    // Predicated region
    $region42: #{tpu_custom_call.1} parent=1 // pred_check
      _
    $region43: #{tpu_custom_call.1} parent=1 // pred_check_branch
      %82 = sbr.rel (0) target = $region45
    $region44: #{tpu_custom_call.1} parent=1 // pred_region
      %83 = dma.done [#allocation9], 64
    $region45: #{tpu_custom_call.1} parent=1 // pred_fallthru
      _
    // Predicated region
    $region46: #{tpu_custom_call.1} parent=1 // pred_check
      _
    $region47: #{tpu_custom_call.1} parent=1 // pred_check_branch
      %85 = sbr.rel (0) target = $region49
    $region48: #{tpu_custom_call.1} parent=1 // pred_region
      %86 = dma.done [#allocation9], 64
    $region49: #{tpu_custom_call.1} parent=1 // pred_fallthru
      _
    %v88 = vld [vmem:[#allocation3] sm:$0xff]
    %v89 = vld [vmem:[#allocation3 + $0x8] sm:$0xff]
    %v90 = vld [vmem:[#allocation3 + $0x10] sm:$0xff]
    %v91 = vld [vmem:[#allocation3 + $0x18] sm:$0xff]
    %v92 = vld [vmem:[#allocation3 + $0x20] sm:$0xff]
    %v93 = vld [vmem:[#allocation3 + $0x28] sm:$0xff]
    %v94 = vld [vmem:[#allocation3 + $0x30] sm:$0xff]
    %v95 = vld [vmem:[#allocation3 + $0x38] sm:$0xff]
    %v96 = vld [vmem:[#allocation3 + $0x40] sm:$0xff]
    %v97 = vld [vmem:[#allocation3 + $0x48] sm:$0xff]
    %v98 = vpack.c.bf16 %v88, %v88
    %v99 = vpack.c.bf16 %v89, %v89
    %v100 = vpack.c.bf16 %v90, %v90
    %v101 = vpack.c.bf16 %v91, %v91
    %v102 = vpack.c.bf16 %v92, %v92
    %v103 = vpack.c.bf16 %v93, %v93
    %v104 = vpack.c.bf16 %v94, %v94
    %v105 = vpack.c.bf16 %v95, %v95
    %v106 = vpack.c.bf16 %v96, %v96
    %v107 = vpack.c.bf16 %v97, %v97
    %v108 = vld [vmem:[%s1] sm:$0xff]
    %v109 = vpack.c.bf16 %v108, %v108
    %v110 = vld [vmem:[#allocation5] sm:$0xff]
    %v111 = vld [vmem:[#allocation5 + $0x8] sm:$0xff]
    %v112 = vld [vmem:[#allocation5 + $0x10] sm:$0xff]
    %v113 = vld [vmem:[#allocation5 + $0x18] sm:$0xff]
    %v114 = vld [vmem:[#allocation5 + $0x20] sm:$0xff]
    %v115 = vld [vmem:[#allocation5 + $0x28] sm:$0xff]
    %v116 = vld [vmem:[#allocation5 + $0x30] sm:$0xff]
    %v117 = vld [vmem:[#allocation5 + $0x38] sm:$0xff]
    %v118 = vld [vmem:[#allocation5 + $0x40] sm:$0xff]
    %v119 = vld [vmem:[#allocation5 + $0x48] sm:$0xff]
    %v120 = vld [vmem:[#allocation5 + $0x50] sm:$0xff]
    %v121 = vld [vmem:[#allocation5 + $0x58] sm:$0xff]
    %v122 = vld [vmem:[#allocation5 + $0x60] sm:$0xff]
    %v123 = vld [vmem:[#allocation5 + $0x68] sm:$0xff]
    %v124 = vld [vmem:[#allocation5 + $0x70] sm:$0xff]
    %v125 = vld [vmem:[#allocation5 + $0x78] sm:$0xff]
    %v126 = vld [vmem:[#allocation5 + $0x80] sm:$0xff]
    %v127 = vld [vmem:[#allocation5 + $0x88] sm:$0xff]
    %v128 = vld [vmem:[#allocation5 + $0x90] sm:$0xff]
    %v129 = vld [vmem:[#allocation5 + $0x98] sm:$0xff]
    %v130 = vld [vmem:[#allocation5 + $0xa0] sm:$0xff]
    %v131 = vld [vmem:[#allocation5 + $0xa8] sm:$0xff]
    %v132 = vld [vmem:[#allocation5 + $0xb0] sm:$0xff]
    %v133 = vld [vmem:[#allocation5 + $0xb8] sm:$0xff]
    %v134 = vld [vmem:[#allocation5 + $0xc0] sm:$0xff]
    %v135 = vld [vmem:[#allocation5 + $0xc8] sm:$0xff]
    %v136 = vld [vmem:[#allocation5 + $0xd0] sm:$0xff]
    %v137 = vld [vmem:[#allocation5 + $0xd8] sm:$0xff]
    %v138 = vld [vmem:[#allocation5 + $0xe0] sm:$0xff]
    %v139 = vld [vmem:[#allocation5 + $0xe8] sm:$0xff]
    %v140 = vld [vmem:[#allocation5 + $0xf0] sm:$0xff]
    %v141 = vld [vmem:[#allocation5 + $0xf8] sm:$0xff]
    %v142 = vld [vmem:[#allocation5 + $0x100] sm:$0xff]
    %v143 = vld [vmem:[#allocation5 + $0x108] sm:$0xff]
    %v144 = vld [vmem:[#allocation5 + $0x110] sm:$0xff]
    %v145 = vld [vmem:[#allocation5 + $0x118] sm:$0xff]
    %v146 = vld [vmem:[#allocation5 + $0x120] sm:$0xff]
    %v147 = vld [vmem:[#allocation5 + $0x128] sm:$0xff]
    %v148 = vld [vmem:[#allocation5 + $0x130] sm:$0xff]
    %v149 = vld [vmem:[#allocation5 + $0x138] sm:$0xff]
    %v150 = vld [vmem:[#allocation5 + $0x140] sm:$0xff]
    %v151 = vld [vmem:[#allocation5 + $0x148] sm:$0xff]
    %v152 = vld [vmem:[#allocation5 + $0x150] sm:$0xff]
    %v153 = vld [vmem:[#allocation5 + $0x158] sm:$0xff]
    %v154 = vld [vmem:[#allocation5 + $0x160] sm:$0xff]
    %v155 = vld [vmem:[#allocation5 + $0x168] sm:$0xff]
    %v156 = vld [vmem:[#allocation5 + $0x170] sm:$0xff]
    %v157 = vld [vmem:[#allocation5 + $0x178] sm:$0xff]
    %v158 = vld [vmem:[#allocation5 + $0x180] sm:$0xff]
    %v159 = vld [vmem:[#allocation5 + $0x188] sm:$0xff]
    %v160 = vld [vmem:[#allocation5 + $0x190] sm:$0xff]
    %v161 = vld [vmem:[#allocation5 + $0x198] sm:$0xff]
    %v162 = vld [vmem:[#allocation5 + $0x1a0] sm:$0xff]
    %v163 = vld [vmem:[#allocation5 + $0x1a8] sm:$0xff]
    %v164 = vld [vmem:[#allocation5 + $0x1b0] sm:$0xff]
    %v165 = vld [vmem:[#allocation5 + $0x1b8] sm:$0xff]
    %v166 = vld [vmem:[#allocation5 + $0x1c0] sm:$0xff]
    %v167 = vld [vmem:[#allocation5 + $0x1c8] sm:$0xff]
    %v168 = vld [vmem:[#allocation5 + $0x1d0] sm:$0xff]
    %v169 = vld [vmem:[#allocation5 + $0x1d8] sm:$0xff]
    %v170 = vld [vmem:[#allocation5 + $0x1e0] sm:$0xff]
    %v171 = vld [vmem:[#allocation5 + $0x1e8] sm:$0xff]
    %v172 = vld [vmem:[#allocation5 + $0x1f0] sm:$0xff]
    %v173 = vld [vmem:[#allocation5 + $0x1f8] sm:$0xff]
    %v174 = vld [vmem:[#allocation5 + $0x200] sm:$0xff]
    %v175 = vld [vmem:[#allocation5 + $0x208] sm:$0xff]
    %v176 = vld [vmem:[#allocation5 + $0x210] sm:$0xff]
    %v177 = vld [vmem:[#allocation5 + $0x218] sm:$0xff]
    %v178 = vld [vmem:[#allocation5 + $0x220] sm:$0xff]
    %v179 = vld [vmem:[#allocation5 + $0x228] sm:$0xff]
    %v180 = vld [vmem:[#allocation5 + $0x230] sm:$0xff]
    %v181 = vld [vmem:[#allocation5 + $0x238] sm:$0xff]
    %v182 = vld [vmem:[#allocation5 + $0x240] sm:$0xff]
    %v183 = vld [vmem:[#allocation5 + $0x248] sm:$0xff]
    %v184 = vld [vmem:[#allocation5 + $0x250] sm:$0xff]
    %v185 = vld [vmem:[#allocation5 + $0x258] sm:$0xff]
    %v186 = vld [vmem:[#allocation5 + $0x260] sm:$0xff]
    %v187 = vld [vmem:[#allocation5 + $0x268] sm:$0xff]
    %v188 = vld [vmem:[#allocation5 + $0x270] sm:$0xff]
    %v189 = vld [vmem:[#allocation5 + $0x278] sm:$0xff]
    %v190 = vld [vmem:[#allocation5 + $0x280] sm:$0xff]
    %v191 = vld [vmem:[#allocation5 + $0x288] sm:$0xff]
    %v192 = vld [vmem:[#allocation5 + $0x290] sm:$0xff]
    %v193 = vld [vmem:[#allocation5 + $0x298] sm:$0xff]
    %v194 = vld [vmem:[#allocation5 + $0x2a0] sm:$0xff]
    %v195 = vld [vmem:[#allocation5 + $0x2a8] sm:$0xff]
    %v196 = vld [vmem:[#allocation5 + $0x2b0] sm:$0xff]
    %v197 = vld [vmem:[#allocation5 + $0x2b8] sm:$0xff]
    %v198 = vld [vmem:[#allocation5 + $0x2c0] sm:$0xff]
    %v199 = vld [vmem:[#allocation5 + $0x2c8] sm:$0xff]
    %v200 = vld [vmem:[#allocation5 + $0x2d0] sm:$0xff]
    %v201 = vld [vmem:[#allocation5 + $0x2d8] sm:$0xff]
    %v202 = vld [vmem:[#allocation5 + $0x2e0] sm:$0xff]
    %v203 = vld [vmem:[#allocation5 + $0x2e8] sm:$0xff]
    %v204 = vld [vmem:[#allocation5 + $0x2f0] sm:$0xff]
    %v205 = vld [vmem:[#allocation5 + $0x2f8] sm:$0xff]
    %v206 = vld [vmem:[#allocation5 + $0x300] sm:$0xff]
    %v207 = vld [vmem:[#allocation5 + $0x308] sm:$0xff]
    %v208 = vld [vmem:[#allocation5 + $0x310] sm:$0xff]
    %v209 = vld [vmem:[#allocation5 + $0x318] sm:$0xff]
    %v210 = vld [vmem:[#allocation5 + $0x320] sm:$0xff]
    %v211 = vld [vmem:[#allocation5 + $0x328] sm:$0xff]
    %v212 = vld [vmem:[#allocation5 + $0x330] sm:$0xff]
    %v213 = vld [vmem:[#allocation5 + $0x338] sm:$0xff]
    %v214 = vld [vmem:[#allocation5 + $0x340] sm:$0xff]
    %v215 = vld [vmem:[#allocation5 + $0x348] sm:$0xff]
    %v216 = vld [vmem:[#allocation5 + $0x350] sm:$0xff]
    %v217 = vld [vmem:[#allocation5 + $0x358] sm:$0xff]
    %v218 = vld [vmem:[#allocation5 + $0x360] sm:$0xff]
    %v219 = vld [vmem:[#allocation5 + $0x368] sm:$0xff]
    %v220 = vld [vmem:[#allocation5 + $0x370] sm:$0xff]
    %v221 = vld [vmem:[#allocation5 + $0x378] sm:$0xff]
    %v222 = vld [vmem:[#allocation5 + $0x380] sm:$0xff]
    %v223 = vld [vmem:[#allocation5 + $0x388] sm:$0xff]
    %v224 = vld [vmem:[#allocation5 + $0x390] sm:$0xff]
    %v225 = vld [vmem:[#allocation5 + $0x398] sm:$0xff]
    %v226 = vld [vmem:[#allocation5 + $0x3a0] sm:$0xff]
    %v227 = vld [vmem:[#allocation5 + $0x3a8] sm:$0xff]
    %v228 = vld [vmem:[#allocation5 + $0x3b0] sm:$0xff]
    %v229 = vld [vmem:[#allocation5 + $0x3b8] sm:$0xff]
    %v230 = vld [vmem:[#allocation5 + $0x3c0] sm:$0xff]
    %v231 = vld [vmem:[#allocation5 + $0x3c8] sm:$0xff]
    %v232 = vld [vmem:[#allocation5 + $0x3d0] sm:$0xff]
    %v233 = vld [vmem:[#allocation5 + $0x3d8] sm:$0xff]
    %v234 = vld [vmem:[#allocation5 + $0x3e0] sm:$0xff]
    %v235 = vld [vmem:[#allocation5 + $0x3e8] sm:$0xff]
    %v236 = vld [vmem:[#allocation5 + $0x3f0] sm:$0xff]
    %v237 = vld [vmem:[#allocation5 + $0x3f8] sm:$0xff]
    %v238 = vld [vmem:[#allocation5 + $0x400] sm:$0xff]
    %v239 = vld [vmem:[#allocation5 + $0x408] sm:$0xff]
    %v240 = vld [vmem:[#allocation5 + $0x410] sm:$0xff]
    %v241 = vld [vmem:[#allocation5 + $0x418] sm:$0xff]
    %v242 = vld [vmem:[#allocation5 + $0x420] sm:$0xff]
    %v243 = vld [vmem:[#allocation5 + $0x428] sm:$0xff]
    %v244 = vld [vmem:[#allocation5 + $0x430] sm:$0xff]
    %v245 = vld [vmem:[#allocation5 + $0x438] sm:$0xff]
    %v246 = vld [vmem:[#allocation5 + $0x440] sm:$0xff]
    %v247 = vld [vmem:[#allocation5 + $0x448] sm:$0xff]
    %v248 = vld [vmem:[#allocation5 + $0x450] sm:$0xff]
    %v249 = vld [vmem:[#allocation5 + $0x458] sm:$0xff]
    %v250 = vld [vmem:[#allocation5 + $0x460] sm:$0xff]
    %v251 = vld [vmem:[#allocation5 + $0x468] sm:$0xff]
    %v252 = vld [vmem:[#allocation5 + $0x470] sm:$0xff]
    %v253 = vld [vmem:[#allocation5 + $0x478] sm:$0xff]
    %v254 = vld [vmem:[#allocation5 + $0x480] sm:$0xff]
    %v255 = vld [vmem:[#allocation5 + $0x488] sm:$0xff]
    %v256 = vld [vmem:[#allocation5 + $0x490] sm:$0xff]
    %v257 = vld [vmem:[#allocation5 + $0x498] sm:$0xff]
    %v258 = vld [vmem:[#allocation5 + $0x4a0] sm:$0xff]
    %v259 = vld [vmem:[#allocation5 + $0x4a8] sm:$0xff]
    %v260 = vld [vmem:[#allocation5 + $0x4b0] sm:$0xff]
    %v261 = vld [vmem:[#allocation5 + $0x4b8] sm:$0xff]
    %v262 = vld [vmem:[#allocation5 + $0x4c0] sm:$0xff]
    %v263 = vld [vmem:[#allocation5 + $0x4c8] sm:$0xff]
    %v264 = vld [vmem:[#allocation5 + $0x4d0] sm:$0xff]
    %v265 = vld [vmem:[#allocation5 + $0x4d8] sm:$0xff]
    %v266 = vld [vmem:[#allocation5 + $0x4e0] sm:$0xff]
    %v267 = vld [vmem:[#allocation5 + $0x4e8] sm:$0xff]
    %v268 = vld [vmem:[#allocation5 + $0x4f0] sm:$0xff]
    %v269 = vld [vmem:[#allocation5 + $0x4f8] sm:$0xff]
    %v270 = vld [vmem:[#allocation5 + $0x500] sm:$0xff]
    %v271 = vld [vmem:[#allocation5 + $0x508] sm:$0xff]
    %v272 = vld [vmem:[#allocation5 + $0x510] sm:$0xff]
    %v273 = vld [vmem:[#allocation5 + $0x518] sm:$0xff]
    %v274 = vld [vmem:[#allocation5 + $0x520] sm:$0xff]
    %v275 = vld [vmem:[#allocation5 + $0x528] sm:$0xff]
    %v276 = vld [vmem:[#allocation5 + $0x530] sm:$0xff]
    %v277 = vld [vmem:[#allocation5 + $0x538] sm:$0xff]
    %v278 = vld [vmem:[#allocation5 + $0x540] sm:$0xff]
    %v279 = vld [vmem:[#allocation5 + $0x548] sm:$0xff]
    %v280 = vld [vmem:[#allocation5 + $0x550] sm:$0xff]
    %v281 = vld [vmem:[#allocation5 + $0x558] sm:$0xff]
    %v282 = vld [vmem:[#allocation5 + $0x560] sm:$0xff]
    %v283 = vld [vmem:[#allocation5 + $0x568] sm:$0xff]
    %v284 = vld [vmem:[#allocation5 + $0x570] sm:$0xff]
    %v285 = vld [vmem:[#allocation5 + $0x578] sm:$0xff]
    %v286 = vld [vmem:[#allocation5 + $0x580] sm:$0xff]
    %v287 = vld [vmem:[#allocation5 + $0x588] sm:$0xff]
    %v288 = vld [vmem:[#allocation5 + $0x590] sm:$0xff]
    %v289 = vld [vmem:[#allocation5 + $0x598] sm:$0xff]
    %v290 = vld [vmem:[#allocation5 + $0x5a0] sm:$0xff]
    %v291 = vld [vmem:[#allocation5 + $0x5a8] sm:$0xff]
    %v292 = vld [vmem:[#allocation5 + $0x5b0] sm:$0xff]
    %v293 = vld [vmem:[#allocation5 + $0x5b8] sm:$0xff]
    %v294 = vld [vmem:[#allocation5 + $0x5c0] sm:$0xff]
    %v295 = vld [vmem:[#allocation5 + $0x5c8] sm:$0xff]
    %v296 = vld [vmem:[#allocation5 + $0x5d0] sm:$0xff]
    %v297 = vld [vmem:[#allocation5 + $0x5d8] sm:$0xff]
    %v298 = vld [vmem:[#allocation5 + $0x5e0] sm:$0xff]
    %v299 = vld [vmem:[#allocation5 + $0x5e8] sm:$0xff]
    %v300 = vld [vmem:[#allocation5 + $0x5f0] sm:$0xff]
    %v301 = vld [vmem:[#allocation5 + $0x5f8] sm:$0xff]
    %v302 = vld [vmem:[#allocation5 + $0x600] sm:$0xff]
    %v303 = vld [vmem:[#allocation5 + $0x608] sm:$0xff]
    %v304 = vld [vmem:[#allocation5 + $0x610] sm:$0xff]
    %v305 = vld [vmem:[#allocation5 + $0x618] sm:$0xff]
    %v306 = vld [vmem:[#allocation5 + $0x620] sm:$0xff]
    %v307 = vld [vmem:[#allocation5 + $0x628] sm:$0xff]
    %v308 = vld [vmem:[#allocation5 + $0x630] sm:$0xff]
    %v309 = vld [vmem:[#allocation5 + $0x638] sm:$0xff]
    %v310 = vld [vmem:[#allocation5 + $0x640] sm:$0xff]
    %v311 = vld [vmem:[#allocation5 + $0x648] sm:$0xff]
    %v312 = vld [vmem:[#allocation5 + $0x650] sm:$0xff]
    %v313 = vld [vmem:[#allocation5 + $0x658] sm:$0xff]
    %v314 = vld [vmem:[#allocation5 + $0x660] sm:$0xff]
    %v315 = vld [vmem:[#allocation5 + $0x668] sm:$0xff]
    %v316 = vld [vmem:[#allocation5 + $0x670] sm:$0xff]
    %v317 = vld [vmem:[#allocation5 + $0x678] sm:$0xff]
    %v318 = vld [vmem:[#allocation5 + $0x680] sm:$0xff]
    %v319 = vld [vmem:[#allocation5 + $0x688] sm:$0xff]
    %v320 = vld [vmem:[#allocation5 + $0x690] sm:$0xff]
    %v321 = vld [vmem:[#allocation5 + $0x698] sm:$0xff]
    %v322 = vld [vmem:[#allocation5 + $0x6a0] sm:$0xff]
    %v323 = vld [vmem:[#allocation5 + $0x6a8] sm:$0xff]
    %v324 = vld [vmem:[#allocation5 + $0x6b0] sm:$0xff]
    %v325 = vld [vmem:[#allocation5 + $0x6b8] sm:$0xff]
    %v326 = vld [vmem:[#allocation5 + $0x6c0] sm:$0xff]
    %v327 = vld [vmem:[#allocation5 + $0x6c8] sm:$0xff]
    %v328 = vld [vmem:[#allocation5 + $0x6d0] sm:$0xff]
    %v329 = vld [vmem:[#allocation5 + $0x6d8] sm:$0xff]
    %v330 = vld [vmem:[#allocation5 + $0x6e0] sm:$0xff]
    %v331 = vld [vmem:[#allocation5 + $0x6e8] sm:$0xff]
    %v332 = vld [vmem:[#allocation5 + $0x6f0] sm:$0xff]
    %v333 = vld [vmem:[#allocation5 + $0x6f8] sm:$0xff]
    %v334 = vld [vmem:[#allocation5 + $0x700] sm:$0xff]
    %v335 = vld [vmem:[#allocation5 + $0x708] sm:$0xff]
    %v336 = vld [vmem:[#allocation5 + $0x710] sm:$0xff]
    %v337 = vld [vmem:[#allocation5 + $0x718] sm:$0xff]
    %v338 = vld [vmem:[#allocation5 + $0x720] sm:$0xff]
    %v339 = vld [vmem:[#allocation5 + $0x728] sm:$0xff]
    %v340 = vld [vmem:[#allocation5 + $0x730] sm:$0xff]
    %v341 = vld [vmem:[#allocation5 + $0x738] sm:$0xff]
    %v342 = vld [vmem:[#allocation5 + $0x740] sm:$0xff]
    %v343 = vld [vmem:[#allocation5 + $0x748] sm:$0xff]
    %v344 = vld [vmem:[#allocation5 + $0x750] sm:$0xff]
    %v345 = vld [vmem:[#allocation5 + $0x758] sm:$0xff]
    %v346 = vld [vmem:[#allocation5 + $0x760] sm:$0xff]
    %v347 = vld [vmem:[#allocation5 + $0x768] sm:$0xff]
    %v348 = vld [vmem:[#allocation5 + $0x770] sm:$0xff]
    %v349 = vld [vmem:[#allocation5 + $0x778] sm:$0xff]
    %v350 = vld [vmem:[#allocation5 + $0x780] sm:$0xff]
    %v351 = vld [vmem:[#allocation5 + $0x788] sm:$0xff]
    %v352 = vld [vmem:[#allocation5 + $0x790] sm:$0xff]
    %v353 = vld [vmem:[#allocation5 + $0x798] sm:$0xff]
    %v354 = vld [vmem:[#allocation5 + $0x7a0] sm:$0xff]
    %v355 = vld [vmem:[#allocation5 + $0x7a8] sm:$0xff]
    %v356 = vld [vmem:[#allocation5 + $0x7b0] sm:$0xff]
    %v357 = vld [vmem:[#allocation5 + $0x7b8] sm:$0xff]
    %v358 = vld [vmem:[#allocation5 + $0x7c0] sm:$0xff]
    %v359 = vld [vmem:[#allocation5 + $0x7c8] sm:$0xff]
    %v360 = vld [vmem:[#allocation5 + $0x7d0] sm:$0xff]
    %v361 = vld [vmem:[#allocation5 + $0x7d8] sm:$0xff]
    %v362 = vld [vmem:[#allocation5 + $0x7e0] sm:$0xff]
    %v363 = vld [vmem:[#allocation5 + $0x7e8] sm:$0xff]
    %v364 = vld [vmem:[#allocation5 + $0x7f0] sm:$0xff]
    %v365 = vld [vmem:[#allocation5 + $0x7f8] sm:$0xff]
    %v366 = vld [vmem:[#allocation5 + $0x800] sm:$0xff]
    %v367 = vld [vmem:[#allocation5 + $0x808] sm:$0xff]
    %v368 = vld [vmem:[#allocation5 + $0x810] sm:$0xff]
    %v369 = vld [vmem:[#allocation5 + $0x818] sm:$0xff]
    %v370 = vld [vmem:[#allocation5 + $0x820] sm:$0xff]
    %v371 = vld [vmem:[#allocation5 + $0x828] sm:$0xff]
    %v372 = vld [vmem:[#allocation5 + $0x830] sm:$0xff]
    %v373 = vld [vmem:[#allocation5 + $0x838] sm:$0xff]
    %v374 = vld [vmem:[#allocation5 + $0x840] sm:$0xff]
    %v375 = vld [vmem:[#allocation5 + $0x848] sm:$0xff]
    %v376 = vld [vmem:[#allocation5 + $0x850] sm:$0xff]
    %v377 = vld [vmem:[#allocation5 + $0x858] sm:$0xff]
    %v378 = vld [vmem:[#allocation5 + $0x860] sm:$0xff]
    %v379 = vld [vmem:[#allocation5 + $0x868] sm:$0xff]
    %v380 = vld [vmem:[#allocation5 + $0x870] sm:$0xff]
    %v381 = vld [vmem:[#allocation5 + $0x878] sm:$0xff]
    %v382 = vld [vmem:[#allocation5 + $0x880] sm:$0xff]
    %v383 = vld [vmem:[#allocation5 + $0x888] sm:$0xff]
    %v384 = vld [vmem:[#allocation5 + $0x890] sm:$0xff]
    %v385 = vld [vmem:[#allocation5 + $0x898] sm:$0xff]
    %v386 = vld [vmem:[#allocation5 + $0x8a0] sm:$0xff]
    %v387 = vld [vmem:[#allocation5 + $0x8a8] sm:$0xff]
    %v388 = vld [vmem:[#allocation5 + $0x8b0] sm:$0xff]
    %v389 = vld [vmem:[#allocation5 + $0x8b8] sm:$0xff]
    %v390 = vld [vmem:[#allocation5 + $0x8c0] sm:$0xff]
    %v391 = vld [vmem:[#allocation5 + $0x8c8] sm:$0xff]
    %v392 = vld [vmem:[#allocation5 + $0x8d0] sm:$0xff]
    %v393 = vld [vmem:[#allocation5 + $0x8d8] sm:$0xff]
    %v394 = vld [vmem:[#allocation5 + $0x8e0] sm:$0xff]
    %v395 = vld [vmem:[#allocation5 + $0x8e8] sm:$0xff]
    %v396 = vld [vmem:[#allocation5 + $0x8f0] sm:$0xff]
    %v397 = vld [vmem:[#allocation5 + $0x8f8] sm:$0xff]
    %v398 = vld [vmem:[#allocation5 + $0x900] sm:$0xff]
    %v399 = vld [vmem:[#allocation5 + $0x908] sm:$0xff]
    %v400 = vld [vmem:[#allocation5 + $0x910] sm:$0xff]
    %v401 = vld [vmem:[#allocation5 + $0x918] sm:$0xff]
    %v402 = vld [vmem:[#allocation5 + $0x920] sm:$0xff]
    %v403 = vld [vmem:[#allocation5 + $0x928] sm:$0xff]
    %v404 = vld [vmem:[#allocation5 + $0x930] sm:$0xff]
    %v405 = vld [vmem:[#allocation5 + $0x938] sm:$0xff]
    %v406 = vld [vmem:[#allocation5 + $0x940] sm:$0xff]
    %v407 = vld [vmem:[#allocation5 + $0x948] sm:$0xff]
    %v408 = vld [vmem:[#allocation5 + $0x950] sm:$0xff]
    %v409 = vld [vmem:[#allocation5 + $0x958] sm:$0xff]
    %v410 = vld [vmem:[#allocation7] sm:$0xf]
    %v413 = vunpack.c.l.s4 1966171168
    %v414 = vunpack.c.0.s8 %v413
    %v415 = vlaneseq
    %v416 = vshrl.u32 %v415, 7
    %v417 = vsub.s32 %v414, %v416
    %v418 = vrot.slane %v410, %v417
    %v419 = vcombine.high %v418, %v418
    %v421 = vunpack.c.l.s4 1966171168
    %v422 = vunpack.c.0.s8 %v421
    %v423 = vlaneseq
    %v424 = vshrl.u32 %v423, 7
    %v425 = vsub.s32 %v422, %v424
    %v426 = vrot.slane %v418, %v425
    %v428 = vunpack.c.l.s4 1966171168
    %v429 = vunpack.c.0.s8 %v428
    %v430 = vlaneseq
    %v431 = vshrl.u32 %v430, 7
    %v432 = vsub.s32 %v429, %v431
    %v433 = vrot.slane %v419, %v432
    %v434 = vcombine.high %v426, %v426
    %v435 = vcombine.high %v433, %v433
    %vm436 = vcmask 15360
    %v438 = vsel %vm436, %v109, 0
    %vm440 = vcmask 1040384
    %v442 = vsel %vm440, %v426, 0
    %v445 = vsel %vm440, %v433, 0
    %v448 = vsel %vm440, %v434, 0
    %v451 = vsel %vm440, %v435, 0
    %453 = vmatprep.subr.bf16.mxu0 %v445
    %454 = vmatpush1.bf16.msra.mxu0 %v442
    %455 = vmatprep.subr.bf16.mxu0 0
    %456 = vmatpush1.bf16.msra.mxu0 0
    %457 = vmatprep.subr.bf16.mxu0 0
    %458 = vmatpush1.bf16.msra.mxu0 0
    %459 = vmatprep.subr.bf16.mxu0 0
    %460 = vmatpush1.bf16.msra.mxu0 0
    %461 = vmatprep.subr.bf16.mxu0 0
    %462 = vmatpush1.bf16.msra.mxu0 0
    %463 = vmatprep.subr.bf16.mxu0 0
    %464 = vmatpush1.bf16.msra.mxu0 0
    %465 = vmatprep.subr.bf16.mxu0 0
    %466 = vmatpush1.bf16.msra.mxu0 0
    %467 = vmatprep.subr.bf16.mxu0 0
    %468 = vmatpush1.bf16.msra.mxu0 0
    %469 = vmatprep.subr.bf16.mxu0 0
    %470 = vmatpush1.bf16.msra.mxu0 0
    %471 = vmatprep.subr.bf16.mxu0 0
    %472 = vmatpush1.bf16.msra.mxu0 0
    %473 = vmatprep.subr.bf16.mxu0 0
    %474 = vmatpush1.bf16.msra.mxu0 0
    %475 = vmatprep.subr.bf16.mxu0 0
    %476 = vmatpush1.bf16.msra.mxu0 0
    %477 = vmatprep.subr.bf16.mxu0 0
    %478 = vmatpush1.bf16.msra.mxu0 0
    %479 = vmatprep.subr.bf16.mxu0 0
    %480 = vmatpush1.bf16.msra.mxu0 0
    %481 = vmatprep.subr.bf16.mxu0 0
    %482 = vmatpush1.bf16.msra.mxu0 0
    %483 = vmatprep.subr.bf16.mxu0 0
    %484 = vmatpush1.bf16.msra.mxu0 0
    %485 = vmatprep.mubr.bf16.mxu0 0
    %486 = vmatmul.mubr.bf16.gmra.mrb[0].mxu0 %v438
    %v487 = vpop.f32.mrb[0].mxu0
    %v488 = vadd.f32 0.0, %v487
    %v489 = vpop.f32.mrb[0].mxu0
    %v490 = vadd.f32 0.0, %v489
    %v491 = vpop.f32.mrb[0].mxu0
    %v492 = vpop.f32.mrb[0].mxu0
    %493 = vdwg.mxu0
    %494 = vmatprep.subr.bf16.mxu0 %v451
    %495 = vmatpush1.bf16.msra.mxu0 %v448
    %496 = vmatprep.subr.bf16.mxu0 0
    %497 = vmatpush1.bf16.msra.mxu0 0
    %498 = vmatprep.subr.bf16.mxu0 0
    %499 = vmatpush1.bf16.msra.mxu0 0
    %500 = vmatprep.subr.bf16.mxu0 0
    %501 = vmatpush1.bf16.msra.mxu0 0
    %502 = vmatprep.subr.bf16.mxu0 0
    %503 = vmatpush1.bf16.msra.mxu0 0
    %504 = vmatprep.subr.bf16.mxu0 0
    %505 = vmatpush1.bf16.msra.mxu0 0
    %506 = vmatprep.subr.bf16.mxu0 0
    %507 = vmatpush1.bf16.msra.mxu0 0
    %508 = vmatprep.subr.bf16.mxu0 0
    %509 = vmatpush1.bf16.msra.mxu0 0
    %510 = vmatprep.subr.bf16.mxu0 0
    %511 = vmatpush1.bf16.msra.mxu0 0
    %512 = vmatprep.subr.bf16.mxu0 0
    %513 = vmatpush1.bf16.msra.mxu0 0
    %514 = vmatprep.subr.bf16.mxu0 0
    %515 = vmatpush1.bf16.msra.mxu0 0
    %516 = vmatprep.subr.bf16.mxu0 0
    %517 = vmatpush1.bf16.msra.mxu0 0
    %518 = vmatprep.subr.bf16.mxu0 0
    %519 = vmatpush1.bf16.msra.mxu0 0
    %520 = vmatprep.subr.bf16.mxu0 0
    %521 = vmatpush1.bf16.msra.mxu0 0
    %522 = vmatprep.subr.bf16.mxu0 0
    %523 = vmatpush1.bf16.msra.mxu0 0
    %524 = vmatprep.subr.bf16.mxu0 0
    %525 = vmatpush1.bf16.msra.mxu0 0
    %526 = vmatprep.mubr.bf16.mxu0 0
    %527 = vmatmul.mubr.bf16.gmra.mrb[0].mxu0 %v438
    %v528 = vpop.f32.mrb[0].mxu0
    %v529 = vadd.f32 0.0, %v528
    %v530 = vpop.f32.mrb[0].mxu0
    %v531 = vadd.f32 0.0, %v530
    %v532 = vpop.f32.mrb[0].mxu0
    %v533 = vpop.f32.mrb[0].mxu0
    %534 = vdwg.mxu0
    %v835 = vunpack.c.l.b16 %v110
    %v836 = vunpack.c.h.b16 %v110
    %v837 = vunpack.c.l.b16 %v111
    %v838 = vunpack.c.h.b16 %v111
    %v839 = vunpack.c.l.b16 %v112
    %v840 = vunpack.c.h.b16 %v112
    %v841 = vunpack.c.l.b16 %v113
    %v842 = vunpack.c.h.b16 %v113
    %v843 = vunpack.c.l.b16 %v114
    %v844 = vunpack.c.h.b16 %v114
    %v845 = vunpack.c.l.b16 %v115
    %v846 = vunpack.c.h.b16 %v115
    %v847 = vunpack.c.l.b16 %v116
    %v848 = vunpack.c.h.b16 %v116
    %v849 = vunpack.c.l.b16 %v117
    %v850 = vunpack.c.h.b16 %v117
    %v851 = vunpack.c.l.b16 %v118
    %v852 = vunpack.c.h.b16 %v118
    %v853 = vunpack.c.l.b16 %v119
    %v854 = vunpack.c.h.b16 %v119
    %v855 = vunpack.c.l.b16 %v120
    %v856 = vunpack.c.h.b16 %v120
    %v857 = vunpack.c.l.b16 %v121
    %v858 = vunpack.c.h.b16 %v121
    %v859 = vunpack.c.l.b16 %v122
    %v860 = vunpack.c.h.b16 %v122
    %v861 = vunpack.c.l.b16 %v123
    %v862 = vunpack.c.h.b16 %v123
    %v863 = vunpack.c.l.b16 %v124
    %v864 = vunpack.c.h.b16 %v124
    %v865 = vunpack.c.l.b16 %v125
    %v866 = vunpack.c.h.b16 %v125
    %v867 = vunpack.c.l.b16 %v126
    %v868 = vunpack.c.h.b16 %v126
    %v869 = vunpack.c.l.b16 %v127
    %v870 = vunpack.c.h.b16 %v127
    %v871 = vunpack.c.l.b16 %v128
    %v872 = vunpack.c.h.b16 %v128
    %v873 = vunpack.c.l.b16 %v129
    %v874 = vunpack.c.h.b16 %v129
    %v875 = vunpack.c.l.b16 %v130
    %v876 = vunpack.c.h.b16 %v130
    %v877 = vunpack.c.l.b16 %v131
    %v878 = vunpack.c.h.b16 %v131
    %v879 = vunpack.c.l.b16 %v132
    %v880 = vunpack.c.h.b16 %v132
    %v881 = vunpack.c.l.b16 %v133
    %v882 = vunpack.c.h.b16 %v133
    %v883 = vunpack.c.l.b16 %v134
    %v884 = vunpack.c.h.b16 %v134
    %v885 = vunpack.c.l.b16 %v135
    %v886 = vunpack.c.h.b16 %v135
    %v887 = vunpack.c.l.b16 %v136
    %v888 = vunpack.c.h.b16 %v136
    %v889 = vunpack.c.l.b16 %v137
    %v890 = vunpack.c.h.b16 %v137
    %v891 = vunpack.c.l.b16 %v138
    %v892 = vunpack.c.h.b16 %v138
    %v893 = vunpack.c.l.b16 %v139
    %v894 = vunpack.c.h.b16 %v139
    %v895 = vunpack.c.l.b16 %v140
    %v896 = vunpack.c.h.b16 %v140
    %v897 = vunpack.c.l.b16 %v141
    %v898 = vunpack.c.h.b16 %v141
    %v899 = vunpack.c.l.b16 %v142
    %v900 = vunpack.c.h.b16 %v142
    %v901 = vunpack.c.l.b16 %v143
    %v902 = vunpack.c.h.b16 %v143
    %v903 = vunpack.c.l.b16 %v144
    %v904 = vunpack.c.h.b16 %v144
    %v905 = vunpack.c.l.b16 %v145
    %v906 = vunpack.c.h.b16 %v145
    %v907 = vunpack.c.l.b16 %v146
    %v908 = vunpack.c.h.b16 %v146
    %v909 = vunpack.c.l.b16 %v147
    %v910 = vunpack.c.h.b16 %v147
    %v911 = vunpack.c.l.b16 %v148
    %v912 = vunpack.c.h.b16 %v148
    %v913 = vunpack.c.l.b16 %v149
    %v914 = vunpack.c.h.b16 %v149
    %v915 = vunpack.c.l.b16 %v150
    %v916 = vunpack.c.h.b16 %v150
    %v917 = vunpack.c.l.b16 %v151
    %v918 = vunpack.c.h.b16 %v151
    %v919 = vunpack.c.l.b16 %v152
    %v920 = vunpack.c.h.b16 %v152
    %v921 = vunpack.c.l.b16 %v153
    %v922 = vunpack.c.h.b16 %v153
    %v923 = vunpack.c.l.b16 %v154
    %v924 = vunpack.c.h.b16 %v154
    %v925 = vunpack.c.l.b16 %v155
    %v926 = vunpack.c.h.b16 %v155
    %v927 = vunpack.c.l.b16 %v156
    %v928 = vunpack.c.h.b16 %v156
    %v929 = vunpack.c.l.b16 %v157
    %v930 = vunpack.c.h.b16 %v157
    %v931 = vunpack.c.l.b16 %v158
    %v932 = vunpack.c.h.b16 %v158
    %v933 = vunpack.c.l.b16 %v159
    %v934 = vunpack.c.h.b16 %v159
    %v935 = vunpack.c.l.b16 %v160
    %v936 = vunpack.c.h.b16 %v160
    %v937 = vunpack.c.l.b16 %v161
    %v938 = vunpack.c.h.b16 %v161
    %v939 = vunpack.c.l.b16 %v162
    %v940 = vunpack.c.h.b16 %v162
    %v941 = vunpack.c.l.b16 %v163
    %v942 = vunpack.c.h.b16 %v163
    %v943 = vunpack.c.l.b16 %v164
    %v944 = vunpack.c.h.b16 %v164
    %v945 = vunpack.c.l.b16 %v165
    %v946 = vunpack.c.h.b16 %v165
    %v947 = vunpack.c.l.b16 %v166
    %v948 = vunpack.c.h.b16 %v166
    %v949 = vunpack.c.l.b16 %v167
    %v950 = vunpack.c.h.b16 %v167
    %v951 = vunpack.c.l.b16 %v168
    %v952 = vunpack.c.h.b16 %v168
    %v953 = vunpack.c.l.b16 %v169
    %v954 = vunpack.c.h.b16 %v169
    %v955 = vunpack.c.l.b16 %v170
    %v956 = vunpack.c.h.b16 %v170
    %v957 = vunpack.c.l.b16 %v171
    %v958 = vunpack.c.h.b16 %v171
    %v959 = vunpack.c.l.b16 %v172
    %v960 = vunpack.c.h.b16 %v172
    %v961 = vunpack.c.l.b16 %v173
    %v962 = vunpack.c.h.b16 %v173
    %v963 = vunpack.c.l.b16 %v174
    %v964 = vunpack.c.h.b16 %v174
    %v965 = vunpack.c.l.b16 %v175
    %v966 = vunpack.c.h.b16 %v175
    %v967 = vunpack.c.l.b16 %v176
    %v968 = vunpack.c.h.b16 %v176
    %v969 = vunpack.c.l.b16 %v177
    %v970 = vunpack.c.h.b16 %v177
    %v971 = vunpack.c.l.b16 %v178
    %v972 = vunpack.c.h.b16 %v178
    %v973 = vunpack.c.l.b16 %v179
    %v974 = vunpack.c.h.b16 %v179
    %v975 = vunpack.c.l.b16 %v180
    %v976 = vunpack.c.h.b16 %v180
    %v977 = vunpack.c.l.b16 %v181
    %v978 = vunpack.c.h.b16 %v181
    %v979 = vunpack.c.l.b16 %v182
    %v980 = vunpack.c.h.b16 %v182
    %v981 = vunpack.c.l.b16 %v183
    %v982 = vunpack.c.h.b16 %v183
    %v983 = vunpack.c.l.b16 %v184
    %v984 = vunpack.c.h.b16 %v184
    %v985 = vunpack.c.l.b16 %v185
    %v986 = vunpack.c.h.b16 %v185
    %v987 = vunpack.c.l.b16 %v186
    %v988 = vunpack.c.h.b16 %v186
    %v989 = vunpack.c.l.b16 %v187
    %v990 = vunpack.c.h.b16 %v187
    %v991 = vunpack.c.l.b16 %v188
    %v992 = vunpack.c.h.b16 %v188
    %v993 = vunpack.c.l.b16 %v189
    %v994 = vunpack.c.h.b16 %v189
    %v995 = vunpack.c.l.b16 %v190
    %v996 = vunpack.c.h.b16 %v190
    %v997 = vunpack.c.l.b16 %v191
    %v998 = vunpack.c.h.b16 %v191
    %v999 = vunpack.c.l.b16 %v192
    %v1000 = vunpack.c.h.b16 %v192
    %v1001 = vunpack.c.l.b16 %v193
    %v1002 = vunpack.c.h.b16 %v193
    %v1003 = vunpack.c.l.b16 %v194
    %v1004 = vunpack.c.h.b16 %v194
    %v1005 = vunpack.c.l.b16 %v195
    %v1006 = vunpack.c.h.b16 %v195
    %v1007 = vunpack.c.l.b16 %v196
    %v1008 = vunpack.c.h.b16 %v196
    %v1009 = vunpack.c.l.b16 %v197
    %v1010 = vunpack.c.h.b16 %v197
    %v1011 = vunpack.c.l.b16 %v198
    %v1012 = vunpack.c.h.b16 %v198
    %v1013 = vunpack.c.l.b16 %v199
    %v1014 = vunpack.c.h.b16 %v199
    %v1015 = vunpack.c.l.b16 %v200
    %v1016 = vunpack.c.h.b16 %v200
    %v1017 = vunpack.c.l.b16 %v201
    %v1018 = vunpack.c.h.b16 %v201
    %v1019 = vunpack.c.l.b16 %v202
    %v1020 = vunpack.c.h.b16 %v202
    %v1021 = vunpack.c.l.b16 %v203
    %v1022 = vunpack.c.h.b16 %v203
    %v1023 = vunpack.c.l.b16 %v204
    %v1024 = vunpack.c.h.b16 %v204
    %v1025 = vunpack.c.l.b16 %v205
    %v1026 = vunpack.c.h.b16 %v205
    %v1027 = vunpack.c.l.b16 %v206
    %v1028 = vunpack.c.h.b16 %v206
    %v1029 = vunpack.c.l.b16 %v207
    %v1030 = vunpack.c.h.b16 %v207
    %v1031 = vunpack.c.l.b16 %v208
    %v1032 = vunpack.c.h.b16 %v208
    %v1033 = vunpack.c.l.b16 %v209
    %v1034 = vunpack.c.h.b16 %v209
    %v1035 = vunpack.c.l.b16 %v210
    %v1036 = vunpack.c.h.b16 %v210
    %v1037 = vunpack.c.l.b16 %v211
    %v1038 = vunpack.c.h.b16 %v211
    %v1039 = vunpack.c.l.b16 %v212
    %v1040 = vunpack.c.h.b16 %v212
    %v1041 = vunpack.c.l.b16 %v213
    %v1042 = vunpack.c.h.b16 %v213
    %v1043 = vunpack.c.l.b16 %v214
    %v1044 = vunpack.c.h.b16 %v214
    %v1045 = vunpack.c.l.b16 %v215
    %v1046 = vunpack.c.h.b16 %v215
    %v1047 = vunpack.c.l.b16 %v216
    %v1048 = vunpack.c.h.b16 %v216
    %v1049 = vunpack.c.l.b16 %v217
    %v1050 = vunpack.c.h.b16 %v217
    %v1051 = vunpack.c.l.b16 %v218
    %v1052 = vunpack.c.h.b16 %v218
    %v1053 = vunpack.c.l.b16 %v219
    %v1054 = vunpack.c.h.b16 %v219
    %v1055 = vunpack.c.l.b16 %v220
    %v1056 = vunpack.c.h.b16 %v220
    %v1057 = vunpack.c.l.b16 %v221
    %v1058 = vunpack.c.h.b16 %v221
    %v1059 = vunpack.c.l.b16 %v222
    %v1060 = vunpack.c.h.b16 %v222
    %v1061 = vunpack.c.l.b16 %v223
    %v1062 = vunpack.c.h.b16 %v223
    %v1063 = vunpack.c.l.b16 %v224
    %v1064 = vunpack.c.h.b16 %v224
    %v1065 = vunpack.c.l.b16 %v225
    %v1066 = vunpack.c.h.b16 %v225
    %v1067 = vunpack.c.l.b16 %v226
    %v1068 = vunpack.c.h.b16 %v226
    %v1069 = vunpack.c.l.b16 %v227
    %v1070 = vunpack.c.h.b16 %v227
    %v1071 = vunpack.c.l.b16 %v228
    %v1072 = vunpack.c.h.b16 %v228
    %v1073 = vunpack.c.l.b16 %v229
    %v1074 = vunpack.c.h.b16 %v229
    %v1075 = vunpack.c.l.b16 %v230
    %v1076 = vunpack.c.h.b16 %v230
    %v1077 = vunpack.c.l.b16 %v231
    %v1078 = vunpack.c.h.b16 %v231
    %v1079 = vunpack.c.l.b16 %v232
    %v1080 = vunpack.c.h.b16 %v232
    %v1081 = vunpack.c.l.b16 %v233
    %v1082 = vunpack.c.h.b16 %v233
    %v1083 = vunpack.c.l.b16 %v234
    %v1084 = vunpack.c.h.b16 %v234
    %v1085 = vunpack.c.l.b16 %v235
    %v1086 = vunpack.c.h.b16 %v235
    %v1087 = vunpack.c.l.b16 %v236
    %v1088 = vunpack.c.h.b16 %v236
    %v1089 = vunpack.c.l.b16 %v237
    %v1090 = vunpack.c.h.b16 %v237
    %v1091 = vunpack.c.l.b16 %v238
    %v1092 = vunpack.c.h.b16 %v238
    %v1093 = vunpack.c.l.b16 %v239
    %v1094 = vunpack.c.h.b16 %v239
    %v1095 = vunpack.c.l.b16 %v240
    %v1096 = vunpack.c.h.b16 %v240
    %v1097 = vunpack.c.l.b16 %v241
    %v1098 = vunpack.c.h.b16 %v241
    %v1099 = vunpack.c.l.b16 %v242
    %v1100 = vunpack.c.h.b16 %v242
    %v1101 = vunpack.c.l.b16 %v243
    %v1102 = vunpack.c.h.b16 %v243
    %v1103 = vunpack.c.l.b16 %v244
    %v1104 = vunpack.c.h.b16 %v244
    %v1105 = vunpack.c.l.b16 %v245
    %v1106 = vunpack.c.h.b16 %v245
    %v1107 = vunpack.c.l.b16 %v246
    %v1108 = vunpack.c.h.b16 %v246
    %v1109 = vunpack.c.l.b16 %v247
    %v1110 = vunpack.c.h.b16 %v247
    %v1111 = vunpack.c.l.b16 %v248
    %v1112 = vunpack.c.h.b16 %v248
    %v1113 = vunpack.c.l.b16 %v249
    %v1114 = vunpack.c.h.b16 %v249
    %v1115 = vunpack.c.l.b16 %v250
    %v1116 = vunpack.c.h.b16 %v250
    %v1117 = vunpack.c.l.b16 %v251
    %v1118 = vunpack.c.h.b16 %v251
    %v1119 = vunpack.c.l.b16 %v252
    %v1120 = vunpack.c.h.b16 %v252
    %v1121 = vunpack.c.l.b16 %v253
    %v1122 = vunpack.c.h.b16 %v253
    %v1123 = vunpack.c.l.b16 %v254
    %v1124 = vunpack.c.h.b16 %v254
    %v1125 = vunpack.c.l.b16 %v255
    %v1126 = vunpack.c.h.b16 %v255
    %v1127 = vunpack.c.l.b16 %v256
    %v1128 = vunpack.c.h.b16 %v256
    %v1129 = vunpack.c.l.b16 %v257
    %v1130 = vunpack.c.h.b16 %v257
    %v1131 = vunpack.c.l.b16 %v258
    %v1132 = vunpack.c.h.b16 %v258
    %v1133 = vunpack.c.l.b16 %v259
    %v1134 = vunpack.c.h.b16 %v259
    %v1135 = vunpack.c.l.b16 %v260
    %v1136 = vunpack.c.h.b16 %v260
    %v1137 = vunpack.c.l.b16 %v261
    %v1138 = vunpack.c.h.b16 %v261
    %v1139 = vunpack.c.l.b16 %v262
    %v1140 = vunpack.c.h.b16 %v262
    %v1141 = vunpack.c.l.b16 %v263
    %v1142 = vunpack.c.h.b16 %v263
    %v1143 = vunpack.c.l.b16 %v264
    %v1144 = vunpack.c.h.b16 %v264
    %v1145 = vunpack.c.l.b16 %v265
    %v1146 = vunpack.c.h.b16 %v265
    %v1147 = vunpack.c.l.b16 %v266
    %v1148 = vunpack.c.h.b16 %v266
    %v1149 = vunpack.c.l.b16 %v267
    %v1150 = vunpack.c.h.b16 %v267
    %v1151 = vunpack.c.l.b16 %v268
    %v1152 = vunpack.c.h.b16 %v268
    %v1153 = vunpack.c.l.b16 %v269
    %v1154 = vunpack.c.h.b16 %v269
    %v1155 = vunpack.c.l.b16 %v270
    %v1156 = vunpack.c.h.b16 %v270
    %v1157 = vunpack.c.l.b16 %v271
    %v1158 = vunpack.c.h.b16 %v271
    %v1159 = vunpack.c.l.b16 %v272
    %v1160 = vunpack.c.h.b16 %v272
    %v1161 = vunpack.c.l.b16 %v273
    %v1162 = vunpack.c.h.b16 %v273
    %v1163 = vunpack.c.l.b16 %v274
    %v1164 = vunpack.c.h.b16 %v274
    %v1165 = vunpack.c.l.b16 %v275
    %v1166 = vunpack.c.h.b16 %v275
    %v1167 = vunpack.c.l.b16 %v276
    %v1168 = vunpack.c.h.b16 %v276
    %v1169 = vunpack.c.l.b16 %v277
    %v1170 = vunpack.c.h.b16 %v277
    %v1171 = vunpack.c.l.b16 %v278
    %v1172 = vunpack.c.h.b16 %v278
    %v1173 = vunpack.c.l.b16 %v279
    %v1174 = vunpack.c.h.b16 %v279
    %v1175 = vunpack.c.l.b16 %v280
    %v1176 = vunpack.c.h.b16 %v280
    %v1177 = vunpack.c.l.b16 %v281
    %v1178 = vunpack.c.h.b16 %v281
    %v1179 = vunpack.c.l.b16 %v282
    %v1180 = vunpack.c.h.b16 %v282
    %v1181 = vunpack.c.l.b16 %v283
    %v1182 = vunpack.c.h.b16 %v283
    %v1183 = vunpack.c.l.b16 %v284
    %v1184 = vunpack.c.h.b16 %v284
    %v1185 = vunpack.c.l.b16 %v285
    %v1186 = vunpack.c.h.b16 %v285
    %v1187 = vunpack.c.l.b16 %v286
    %v1188 = vunpack.c.h.b16 %v286
    %v1189 = vunpack.c.l.b16 %v287
    %v1190 = vunpack.c.h.b16 %v287
    %v1191 = vunpack.c.l.b16 %v288
    %v1192 = vunpack.c.h.b16 %v288
    %v1193 = vunpack.c.l.b16 %v289
    %v1194 = vunpack.c.h.b16 %v289
    %v1195 = vunpack.c.l.b16 %v290
    %v1196 = vunpack.c.h.b16 %v290
    %v1197 = vunpack.c.l.b16 %v291
    %v1198 = vunpack.c.h.b16 %v291
    %v1199 = vunpack.c.l.b16 %v292
    %v1200 = vunpack.c.h.b16 %v292
    %v1201 = vunpack.c.l.b16 %v293
    %v1202 = vunpack.c.h.b16 %v293
    %v1203 = vunpack.c.l.b16 %v294
    %v1204 = vunpack.c.h.b16 %v294
    %v1205 = vunpack.c.l.b16 %v295
    %v1206 = vunpack.c.h.b16 %v295
    %v1207 = vunpack.c.l.b16 %v296
    %v1208 = vunpack.c.h.b16 %v296
    %v1209 = vunpack.c.l.b16 %v297
    %v1210 = vunpack.c.h.b16 %v297
    %v1211 = vunpack.c.l.b16 %v298
    %v1212 = vunpack.c.h.b16 %v298
    %v1213 = vunpack.c.l.b16 %v299
    %v1214 = vunpack.c.h.b16 %v299
    %v1215 = vunpack.c.l.b16 %v300
    %v1216 = vunpack.c.h.b16 %v300
    %v1217 = vunpack.c.l.b16 %v301
    %v1218 = vunpack.c.h.b16 %v301
    %v1219 = vunpack.c.l.b16 %v302
    %v1220 = vunpack.c.h.b16 %v302
    %v1221 = vunpack.c.l.b16 %v303
    %v1222 = vunpack.c.h.b16 %v303
    %v1223 = vunpack.c.l.b16 %v304
    %v1224 = vunpack.c.h.b16 %v304
    %v1225 = vunpack.c.l.b16 %v305
    %v1226 = vunpack.c.h.b16 %v305
    %v1227 = vunpack.c.l.b16 %v306
    %v1228 = vunpack.c.h.b16 %v306
    %v1229 = vunpack.c.l.b16 %v307
    %v1230 = vunpack.c.h.b16 %v307
    %v1231 = vunpack.c.l.b16 %v308
    %v1232 = vunpack.c.h.b16 %v308
    %v1233 = vunpack.c.l.b16 %v309
    %v1234 = vunpack.c.h.b16 %v309
    %v1235 = vunpack.c.l.b16 %v310
    %v1236 = vunpack.c.h.b16 %v310
    %v1237 = vunpack.c.l.b16 %v311
    %v1238 = vunpack.c.h.b16 %v311
    %v1239 = vunpack.c.l.b16 %v312
    %v1240 = vunpack.c.h.b16 %v312
    %v1241 = vunpack.c.l.b16 %v313
    %v1242 = vunpack.c.h.b16 %v313
    %v1243 = vunpack.c.l.b16 %v314
    %v1244 = vunpack.c.h.b16 %v314
    %v1245 = vunpack.c.l.b16 %v315
    %v1246 = vunpack.c.h.b16 %v315
    %v1247 = vunpack.c.l.b16 %v316
    %v1248 = vunpack.c.h.b16 %v316
    %v1249 = vunpack.c.l.b16 %v317
    %v1250 = vunpack.c.h.b16 %v317
    %v1251 = vunpack.c.l.b16 %v318
    %v1252 = vunpack.c.h.b16 %v318
    %v1253 = vunpack.c.l.b16 %v319
    %v1254 = vunpack.c.h.b16 %v319
    %v1255 = vunpack.c.l.b16 %v320
    %v1256 = vunpack.c.h.b16 %v320
    %v1257 = vunpack.c.l.b16 %v321
    %v1258 = vunpack.c.h.b16 %v321
    %v1259 = vunpack.c.l.b16 %v322
    %v1260 = vunpack.c.h.b16 %v322
    %v1261 = vunpack.c.l.b16 %v323
    %v1262 = vunpack.c.h.b16 %v323
    %v1263 = vunpack.c.l.b16 %v324
    %v1264 = vunpack.c.h.b16 %v324
    %v1265 = vunpack.c.l.b16 %v325
    %v1266 = vunpack.c.h.b16 %v325
    %v1267 = vunpack.c.l.b16 %v326
    %v1268 = vunpack.c.h.b16 %v326
    %v1269 = vunpack.c.l.b16 %v327
    %v1270 = vunpack.c.h.b16 %v327
    %v1271 = vunpack.c.l.b16 %v328
    %v1272 = vunpack.c.h.b16 %v328
    %v1273 = vunpack.c.l.b16 %v329
    %v1274 = vunpack.c.h.b16 %v329
    %v1275 = vunpack.c.l.b16 %v330
    %v1276 = vunpack.c.h.b16 %v330
    %v1277 = vunpack.c.l.b16 %v331
    %v1278 = vunpack.c.h.b16 %v331
    %v1279 = vunpack.c.l.b16 %v332
    %v1280 = vunpack.c.h.b16 %v332
    %v1281 = vunpack.c.l.b16 %v333
    %v1282 = vunpack.c.h.b16 %v333
    %v1283 = vunpack.c.l.b16 %v334
    %v1284 = vunpack.c.h.b16 %v334
    %v1285 = vunpack.c.l.b16 %v335
    %v1286 = vunpack.c.h.b16 %v335
    %v1287 = vunpack.c.l.b16 %v336
    %v1288 = vunpack.c.h.b16 %v336
    %v1289 = vunpack.c.l.b16 %v337
    %v1290 = vunpack.c.h.b16 %v337
    %v1291 = vunpack.c.l.b16 %v338
    %v1292 = vunpack.c.h.b16 %v338
    %v1293 = vunpack.c.l.b16 %v339
    %v1294 = vunpack.c.h.b16 %v339
    %v1295 = vunpack.c.l.b16 %v340
    %v1296 = vunpack.c.h.b16 %v340
    %v1297 = vunpack.c.l.b16 %v341
    %v1298 = vunpack.c.h.b16 %v341
    %v1299 = vunpack.c.l.b16 %v342
    %v1300 = vunpack.c.h.b16 %v342
    %v1301 = vunpack.c.l.b16 %v343
    %v1302 = vunpack.c.h.b16 %v343
    %v1303 = vunpack.c.l.b16 %v344
    %v1304 = vunpack.c.h.b16 %v344
    %v1305 = vunpack.c.l.b16 %v345
    %v1306 = vunpack.c.h.b16 %v345
    %v1307 = vunpack.c.l.b16 %v346
    %v1308 = vunpack.c.h.b16 %v346
    %v1309 = vunpack.c.l.b16 %v347
    %v1310 = vunpack.c.h.b16 %v347
    %v1311 = vunpack.c.l.b16 %v348
    %v1312 = vunpack.c.h.b16 %v348
    %v1313 = vunpack.c.l.b16 %v349
    %v1314 = vunpack.c.h.b16 %v349
    %v1315 = vunpack.c.l.b16 %v350
    %v1316 = vunpack.c.h.b16 %v350
    %v1317 = vunpack.c.l.b16 %v351
    %v1318 = vunpack.c.h.b16 %v351
    %v1319 = vunpack.c.l.b16 %v352
    %v1320 = vunpack.c.h.b16 %v352
    %v1321 = vunpack.c.l.b16 %v353
    %v1322 = vunpack.c.h.b16 %v353
    %v1323 = vunpack.c.l.b16 %v354
    %v1324 = vunpack.c.h.b16 %v354
    %v1325 = vunpack.c.l.b16 %v355
    %v1326 = vunpack.c.h.b16 %v355
    %v1327 = vunpack.c.l.b16 %v356
    %v1328 = vunpack.c.h.b16 %v356
    %v1329 = vunpack.c.l.b16 %v357
    %v1330 = vunpack.c.h.b16 %v357
    %v1331 = vunpack.c.l.b16 %v358
    %v1332 = vunpack.c.h.b16 %v358
    %v1333 = vunpack.c.l.b16 %v359
    %v1334 = vunpack.c.h.b16 %v359
    %v1335 = vunpack.c.l.b16 %v360
    %v1336 = vunpack.c.h.b16 %v360
    %v1337 = vunpack.c.l.b16 %v361
    %v1338 = vunpack.c.h.b16 %v361
    %v1339 = vunpack.c.l.b16 %v362
    %v1340 = vunpack.c.h.b16 %v362
    %v1341 = vunpack.c.l.b16 %v363
    %v1342 = vunpack.c.h.b16 %v363
    %v1343 = vunpack.c.l.b16 %v364
    %v1344 = vunpack.c.h.b16 %v364
    %v1345 = vunpack.c.l.b16 %v365
    %v1346 = vunpack.c.h.b16 %v365
    %v1347 = vunpack.c.l.b16 %v366
    %v1348 = vunpack.c.h.b16 %v366
    %v1349 = vunpack.c.l.b16 %v367
    %v1350 = vunpack.c.h.b16 %v367
    %v1351 = vunpack.c.l.b16 %v368
    %v1352 = vunpack.c.h.b16 %v368
    %v1353 = vunpack.c.l.b16 %v369
    %v1354 = vunpack.c.h.b16 %v369
    %v1355 = vunpack.c.l.b16 %v370
    %v1356 = vunpack.c.h.b16 %v370
    %v1357 = vunpack.c.l.b16 %v371
    %v1358 = vunpack.c.h.b16 %v371
    %v1359 = vunpack.c.l.b16 %v372
    %v1360 = vunpack.c.h.b16 %v372
    %v1361 = vunpack.c.l.b16 %v373
    %v1362 = vunpack.c.h.b16 %v373
    %v1363 = vunpack.c.l.b16 %v374
    %v1364 = vunpack.c.h.b16 %v374
    %v1365 = vunpack.c.l.b16 %v375
    %v1366 = vunpack.c.h.b16 %v375
    %v1367 = vunpack.c.l.b16 %v376
    %v1368 = vunpack.c.h.b16 %v376
    %v1369 = vunpack.c.l.b16 %v377
    %v1370 = vunpack.c.h.b16 %v377
    %v1371 = vunpack.c.l.b16 %v378
    %v1372 = vunpack.c.h.b16 %v378
    %v1373 = vunpack.c.l.b16 %v379
    %v1374 = vunpack.c.h.b16 %v379
    %v1375 = vunpack.c.l.b16 %v380
    %v1376 = vunpack.c.h.b16 %v380
    %v1377 = vunpack.c.l.b16 %v381
    %v1378 = vunpack.c.h.b16 %v381
    %v1379 = vunpack.c.l.b16 %v382
    %v1380 = vunpack.c.h.b16 %v382
    %v1381 = vunpack.c.l.b16 %v383
    %v1382 = vunpack.c.h.b16 %v383
    %v1383 = vunpack.c.l.b16 %v384
    %v1384 = vunpack.c.h.b16 %v384
    %v1385 = vunpack.c.l.b16 %v385
    %v1386 = vunpack.c.h.b16 %v385
    %v1387 = vunpack.c.l.b16 %v386
    %v1388 = vunpack.c.h.b16 %v386
    %v1389 = vunpack.c.l.b16 %v387
    %v1390 = vunpack.c.h.b16 %v387
    %v1391 = vunpack.c.l.b16 %v388
    %v1392 = vunpack.c.h.b16 %v388
    %v1393 = vunpack.c.l.b16 %v389
    %v1394 = vunpack.c.h.b16 %v389
    %v1395 = vunpack.c.l.b16 %v390
    %v1396 = vunpack.c.h.b16 %v390
    %v1397 = vunpack.c.l.b16 %v391
    %v1398 = vunpack.c.h.b16 %v391
    %v1399 = vunpack.c.l.b16 %v392
    %v1400 = vunpack.c.h.b16 %v392
    %v1401 = vunpack.c.l.b16 %v393
    %v1402 = vunpack.c.h.b16 %v393
    %v1403 = vunpack.c.l.b16 %v394
    %v1404 = vunpack.c.h.b16 %v394
    %v1405 = vunpack.c.l.b16 %v395
    %v1406 = vunpack.c.h.b16 %v395
    %v1407 = vunpack.c.l.b16 %v396
    %v1408 = vunpack.c.h.b16 %v396
    %v1409 = vunpack.c.l.b16 %v397
    %v1410 = vunpack.c.h.b16 %v397
    %v1411 = vunpack.c.l.b16 %v398
    %v1412 = vunpack.c.h.b16 %v398
    %v1413 = vunpack.c.l.b16 %v399
    %v1414 = vunpack.c.h.b16 %v399
    %v1415 = vunpack.c.l.b16 %v400
    %v1416 = vunpack.c.h.b16 %v400
    %v1417 = vunpack.c.l.b16 %v401
    %v1418 = vunpack.c.h.b16 %v401
    %v1419 = vunpack.c.l.b16 %v402
    %v1420 = vunpack.c.h.b16 %v402
    %v1421 = vunpack.c.l.b16 %v403
    %v1422 = vunpack.c.h.b16 %v403
    %v1423 = vunpack.c.l.b16 %v404
    %v1424 = vunpack.c.h.b16 %v404
    %v1425 = vunpack.c.l.b16 %v405
    %v1426 = vunpack.c.h.b16 %v405
    %v1427 = vunpack.c.l.b16 %v406
    %v1428 = vunpack.c.h.b16 %v406
    %v1429 = vunpack.c.l.b16 %v407
    %v1430 = vunpack.c.h.b16 %v407
    %v1431 = vunpack.c.l.b16 %v408
    %v1432 = vunpack.c.h.b16 %v408
    %v1433 = vunpack.c.l.b16 %v409
    %v1434 = vunpack.c.h.b16 %v409
    %v1435 = vpack.c.b16 %v839, %v835
    %v1436 = vpack.c.b16 %v840, %v836
    %v1437 = vpack.c.b16 %v841, %v837
    %v1438 = vpack.c.b16 %v842, %v838
    %v1439 = vpack.c.b16 %v847, %v843
    %v1440 = vpack.c.b16 %v848, %v844
    %v1441 = vpack.c.b16 %v849, %v845
    %v1442 = vpack.c.b16 %v850, %v846
    %v1443 = vpack.c.b16 %v855, %v851
    %v1444 = vpack.c.b16 %v856, %v852
    %v1445 = vpack.c.b16 %v857, %v853
    %v1446 = vpack.c.b16 %v858, %v854
    %v1447 = vpack.c.b16 %v863, %v859
    %v1448 = vpack.c.b16 %v864, %v860
    %v1449 = vpack.c.b16 %v865, %v861
    %v1450 = vpack.c.b16 %v866, %v862
    %v1451 = vpack.c.b16 %v871, %v867
    %v1452 = vpack.c.b16 %v872, %v868
    %v1453 = vpack.c.b16 %v873, %v869
    %v1454 = vpack.c.b16 %v874, %v870
    %v1455 = vpack.c.b16 %v879, %v875
    %v1456 = vpack.c.b16 %v880, %v876
    %v1457 = vpack.c.b16 %v881, %v877
    %v1458 = vpack.c.b16 %v882, %v878
    %v1459 = vpack.c.b16 %v887, %v883
    %v1460 = vpack.c.b16 %v888, %v884
    %v1461 = vpack.c.b16 %v889, %v885
    %v1462 = vpack.c.b16 %v890, %v886
    %v1463 = vpack.c.b16 %v895, %v891
    %v1464 = vpack.c.b16 %v896, %v892
    %v1465 = vpack.c.b16 %v897, %v893
    %v1466 = vpack.c.b16 %v898, %v894
    %v1467 = vpack.c.b16 %v903, %v899
    %v1468 = vpack.c.b16 %v904, %v900
    %v1469 = vpack.c.b16 %v905, %v901
    %v1470 = vpack.c.b16 %v906, %v902
    %v1471 = vpack.c.b16 %v911, %v907
    %v1472 = vpack.c.b16 %v912, %v908
    %v1473 = vpack.c.b16 %v913, %v909
    %v1474 = vpack.c.b16 %v914, %v910
    %v1475 = vpack.c.b16 %v919, %v915
    %v1476 = vpack.c.b16 %v920, %v916
    %v1477 = vpack.c.b16 %v921, %v917
    %v1478 = vpack.c.b16 %v922, %v918
    %v1479 = vpack.c.b16 %v927, %v923
    %v1480 = vpack.c.b16 %v928, %v924
    %v1481 = vpack.c.b16 %v929, %v925
    %v1482 = vpack.c.b16 %v930, %v926
    %v1483 = vpack.c.b16 %v935, %v931
    %v1484 = vpack.c.b16 %v936, %v932
    %v1485 = vpack.c.b16 %v937, %v933
    %v1486 = vpack.c.b16 %v938, %v934
    %v1487 = vpack.c.b16 %v943, %v939
    %v1488 = vpack.c.b16 %v944, %v940
    %v1489 = vpack.c.b16 %v945, %v941
    %v1490 = vpack.c.b16 %v946, %v942
    %v1491 = vpack.c.b16 %v951, %v947
    %v1492 = vpack.c.b16 %v952, %v948
    %v1493 = vpack.c.b16 %v953, %v949
    %v1494 = vpack.c.b16 %v954, %v950
    %v1495 = vpack.c.b16 %v959, %v955
    %v1496 = vpack.c.b16 %v960, %v956
    %v1497 = vpack.c.b16 %v961, %v957
    %v1498 = vpack.c.b16 %v962, %v958
    %v1499 = vpack.c.b16 %v967, %v963
    %v1500 = vpack.c.b16 %v968, %v964
    %v1501 = vpack.c.b16 %v969, %v965
    %v1502 = vpack.c.b16 %v970, %v966
    %v1503 = vpack.c.b16 %v975, %v971
    %v1504 = vpack.c.b16 %v976, %v972
    %v1505 = vpack.c.b16 %v977, %v973
    %v1506 = vpack.c.b16 %v978, %v974
    %v1507 = vpack.c.b16 %v983, %v979
    %v1508 = vpack.c.b16 %v984, %v980
    %v1509 = vpack.c.b16 %v985, %v981
    %v1510 = vpack.c.b16 %v986, %v982
    %v1511 = vpack.c.b16 %v991, %v987
    %v1512 = vpack.c.b16 %v992, %v988
    %v1513 = vpack.c.b16 %v993, %v989
    %v1514 = vpack.c.b16 %v994, %v990
    %v1515 = vpack.c.b16 %v999, %v995
    %v1516 = vpack.c.b16 %v1000, %v996
    %v1517 = vpack.c.b16 %v1001, %v997
    %v1518 = vpack.c.b16 %v1002, %v998
    %v1519 = vpack.c.b16 %v1007, %v1003
    %v1520 = vpack.c.b16 %v1008, %v1004
    %v1521 = vpack.c.b16 %v1009, %v1005
    %v1522 = vpack.c.b16 %v1010, %v1006
    %v1523 = vpack.c.b16 %v1015, %v1011
    %v1524 = vpack.c.b16 %v1016, %v1012
    %v1525 = vpack.c.b16 %v1017, %v1013
    %v1526 = vpack.c.b16 %v1018, %v1014
    %v1527 = vpack.c.b16 %v1023, %v1019
    %v1528 = vpack.c.b16 %v1024, %v1020
    %v1529 = vpack.c.b16 %v1025, %v1021
    %v1530 = vpack.c.b16 %v1026, %v1022
    %v1531 = vpack.c.b16 %v1031, %v1027
    %v1532 = vpack.c.b16 %v1032, %v1028
    %v1533 = vpack.c.b16 %v1033, %v1029
    %v1534 = vpack.c.b16 %v1034, %v1030
    %v1535 = vpack.c.b16 %v1039, %v1035
    %v1536 = vpack.c.b16 %v1040, %v1036
    %v1537 = vpack.c.b16 %v1041, %v1037
    %v1538 = vpack.c.b16 %v1042, %v1038
    %v1539 = vpack.c.b16 %v1047, %v1043
    %v1540 = vpack.c.b16 %v1048, %v1044
    %v1541 = vpack.c.b16 %v1049, %v1045
    %v1542 = vpack.c.b16 %v1050, %v1046
    %v1543 = vpack.c.b16 %v1055, %v1051
    %v1544 = vpack.c.b16 %v1056, %v1052
    %v1545 = vpack.c.b16 %v1057, %v1053
    %v1546 = vpack.c.b16 %v1058, %v1054
    %v1547 = vpack.c.b16 %v1063, %v1059
    %v1548 = vpack.c.b16 %v1064, %v1060
    %v1549 = vpack.c.b16 %v1065, %v1061
    %v1550 = vpack.c.b16 %v1066, %v1062
    %v1551 = vpack.c.b16 %v1071, %v1067
    %v1552 = vpack.c.b16 %v1072, %v1068
    %v1553 = vpack.c.b16 %v1073, %v1069
    %v1554 = vpack.c.b16 %v1074, %v1070
    %v1555 = vpack.c.b16 %v1079, %v1075
    %v1556 = vpack.c.b16 %v1080, %v1076
    %v1557 = vpack.c.b16 %v1081, %v1077
    %v1558 = vpack.c.b16 %v1082, %v1078
    %v1559 = vpack.c.b16 %v1087, %v1083
    %v1560 = vpack.c.b16 %v1088, %v1084
    %v1561 = vpack.c.b16 %v1089, %v1085
    %v1562 = vpack.c.b16 %v1090, %v1086
    %v1563 = vpack.c.b16 %v1095, %v1091
    %v1564 = vpack.c.b16 %v1096, %v1092
    %v1565 = vpack.c.b16 %v1097, %v1093
    %v1566 = vpack.c.b16 %v1098, %v1094
    %v1567 = vpack.c.b16 %v1103, %v1099
    %v1568 = vpack.c.b16 %v1104, %v1100
    %v1569 = vpack.c.b16 %v1105, %v1101
    %v1570 = vpack.c.b16 %v1106, %v1102
    %v1571 = vpack.c.b16 %v1111, %v1107
    %v1572 = vpack.c.b16 %v1112, %v1108
    %v1573 = vpack.c.b16 %v1113, %v1109
    %v1574 = vpack.c.b16 %v1114, %v1110
    %v1575 = vpack.c.b16 %v1119, %v1115
    %v1576 = vpack.c.b16 %v1120, %v1116
    %v1577 = vpack.c.b16 %v1121, %v1117
    %v1578 = vpack.c.b16 %v1122, %v1118
    %v1579 = vpack.c.b16 %v1127, %v1123
    %v1580 = vpack.c.b16 %v1128, %v1124
    %v1581 = vpack.c.b16 %v1129, %v1125
    %v1582 = vpack.c.b16 %v1130, %v1126
    %v1583 = vpack.c.b16 %v1135, %v1131
    %v1584 = vpack.c.b16 %v1136, %v1132
    %v1585 = vpack.c.b16 %v1137, %v1133
    %v1586 = vpack.c.b16 %v1138, %v1134
    %v1587 = vpack.c.b16 %v1143, %v1139
    %v1588 = vpack.c.b16 %v1144, %v1140
    %v1589 = vpack.c.b16 %v1145, %v1141
    %v1590 = vpack.c.b16 %v1146, %v1142
    %v1591 = vpack.c.b16 %v1151, %v1147
    %v1592 = vpack.c.b16 %v1152, %v1148
    %v1593 = vpack.c.b16 %v1153, %v1149
    %v1594 = vpack.c.b16 %v1154, %v1150
    %v1595 = vpack.c.b16 %v1159, %v1155
    %v1596 = vpack.c.b16 %v1160, %v1156
    %v1597 = vpack.c.b16 %v1161, %v1157
    %v1598 = vpack.c.b16 %v1162, %v1158
    %v1599 = vpack.c.b16 %v1167, %v1163
    %v1600 = vpack.c.b16 %v1168, %v1164
    %v1601 = vpack.c.b16 %v1169, %v1165
    %v1602 = vpack.c.b16 %v1170, %v1166
    %v1603 = vpack.c.b16 %v1175, %v1171
    %v1604 = vpack.c.b16 %v1176, %v1172
    %v1605 = vpack.c.b16 %v1177, %v1173
    %v1606 = vpack.c.b16 %v1178, %v1174
    %v1607 = vpack.c.b16 %v1183, %v1179
    %v1608 = vpack.c.b16 %v1184, %v1180
    %v1609 = vpack.c.b16 %v1185, %v1181
    %v1610 = vpack.c.b16 %v1186, %v1182
    %v1611 = vpack.c.b16 %v1191, %v1187
    %v1612 = vpack.c.b16 %v1192, %v1188
    %v1613 = vpack.c.b16 %v1193, %v1189
    %v1614 = vpack.c.b16 %v1194, %v1190
    %v1615 = vpack.c.b16 %v1199, %v1195
    %v1616 = vpack.c.b16 %v1200, %v1196
    %v1617 = vpack.c.b16 %v1201, %v1197
    %v1618 = vpack.c.b16 %v1202, %v1198
    %v1619 = vpack.c.b16 %v1207, %v1203
    %v1620 = vpack.c.b16 %v1208, %v1204
    %v1621 = vpack.c.b16 %v1209, %v1205
    %v1622 = vpack.c.b16 %v1210, %v1206
    %v1623 = vpack.c.b16 %v1215, %v1211
    %v1624 = vpack.c.b16 %v1216, %v1212
    %v1625 = vpack.c.b16 %v1217, %v1213
    %v1626 = vpack.c.b16 %v1218, %v1214
    %v1627 = vpack.c.b16 %v1223, %v1219
    %v1628 = vpack.c.b16 %v1224, %v1220
    %v1629 = vpack.c.b16 %v1225, %v1221
    %v1630 = vpack.c.b16 %v1226, %v1222
    %v1631 = vpack.c.b16 %v1231, %v1227
    %v1632 = vpack.c.b16 %v1232, %v1228
    %v1633 = vpack.c.b16 %v1233, %v1229
    %v1634 = vpack.c.b16 %v1234, %v1230
    %v1635 = vpack.c.b16 %v1239, %v1235
    %v1636 = vpack.c.b16 %v1240, %v1236
    %v1637 = vpack.c.b16 %v1241, %v1237
    %v1638 = vpack.c.b16 %v1242, %v1238
    %v1639 = vpack.c.b16 %v1247, %v1243
    %v1640 = vpack.c.b16 %v1248, %v1244
    %v1641 = vpack.c.b16 %v1249, %v1245
    %v1642 = vpack.c.b16 %v1250, %v1246
    %v1643 = vpack.c.b16 %v1255, %v1251
    %v1644 = vpack.c.b16 %v1256, %v1252
    %v1645 = vpack.c.b16 %v1257, %v1253
    %v1646 = vpack.c.b16 %v1258, %v1254
    %v1647 = vpack.c.b16 %v1263, %v1259
    %v1648 = vpack.c.b16 %v1264, %v1260
    %v1649 = vpack.c.b16 %v1265, %v1261
    %v1650 = vpack.c.b16 %v1266, %v1262
    %v1651 = vpack.c.b16 %v1271, %v1267
    %v1652 = vpack.c.b16 %v1272, %v1268
    %v1653 = vpack.c.b16 %v1273, %v1269
    %v1654 = vpack.c.b16 %v1274, %v1270
    %v1655 = vpack.c.b16 %v1279, %v1275
    %v1656 = vpack.c.b16 %v1280, %v1276
    %v1657 = vpack.c.b16 %v1281, %v1277
    %v1658 = vpack.c.b16 %v1282, %v1278
    %v1659 = vpack.c.b16 %v1287, %v1283
    %v1660 = vpack.c.b16 %v1288, %v1284
    %v1661 = vpack.c.b16 %v1289, %v1285
    %v1662 = vpack.c.b16 %v1290, %v1286
    %v1663 = vpack.c.b16 %v1295, %v1291
    %v1664 = vpack.c.b16 %v1296, %v1292
    %v1665 = vpack.c.b16 %v1297, %v1293
    %v1666 = vpack.c.b16 %v1298, %v1294
    %v1667 = vpack.c.b16 %v1303, %v1299
    %v1668 = vpack.c.b16 %v1304, %v1300
    %v1669 = vpack.c.b16 %v1305, %v1301
    %v1670 = vpack.c.b16 %v1306, %v1302
    %v1671 = vpack.c.b16 %v1311, %v1307
    %v1672 = vpack.c.b16 %v1312, %v1308
    %v1673 = vpack.c.b16 %v1313, %v1309
    %v1674 = vpack.c.b16 %v1314, %v1310
    %v1675 = vpack.c.b16 %v1319, %v1315
    %v1676 = vpack.c.b16 %v1320, %v1316
    %v1677 = vpack.c.b16 %v1321, %v1317
    %v1678 = vpack.c.b16 %v1322, %v1318
    %v1679 = vpack.c.b16 %v1327, %v1323
    %v1680 = vpack.c.b16 %v1328, %v1324
    %v1681 = vpack.c.b16 %v1329, %v1325
    %v1682 = vpack.c.b16 %v1330, %v1326
    %v1683 = vpack.c.b16 %v1335, %v1331
    %v1684 = vpack.c.b16 %v1336, %v1332
    %v1685 = vpack.c.b16 %v1337, %v1333
    %v1686 = vpack.c.b16 %v1338, %v1334
    %v1687 = vpack.c.b16 %v1343, %v1339
    %v1688 = vpack.c.b16 %v1344, %v1340
    %v1689 = vpack.c.b16 %v1345, %v1341
    %v1690 = vpack.c.b16 %v1346, %v1342
    %v1691 = vpack.c.b16 %v1351, %v1347
    %v1692 = vpack.c.b16 %v1352, %v1348
    %v1693 = vpack.c.b16 %v1353, %v1349
    %v1694 = vpack.c.b16 %v1354, %v1350
    %v1695 = vpack.c.b16 %v1359, %v1355
    %v1696 = vpack.c.b16 %v1360, %v1356
    %v1697 = vpack.c.b16 %v1361, %v1357
    %v1698 = vpack.c.b16 %v1362, %v1358
    %v1699 = vpack.c.b16 %v1367, %v1363
    %v1700 = vpack.c.b16 %v1368, %v1364
    %v1701 = vpack.c.b16 %v1369, %v1365
    %v1702 = vpack.c.b16 %v1370, %v1366
    %v1703 = vpack.c.b16 %v1375, %v1371
    %v1704 = vpack.c.b16 %v1376, %v1372
    %v1705 = vpack.c.b16 %v1377, %v1373
    %v1706 = vpack.c.b16 %v1378, %v1374
    %v1707 = vpack.c.b16 %v1383, %v1379
    %v1708 = vpack.c.b16 %v1384, %v1380
    %v1709 = vpack.c.b16 %v1385, %v1381
    %v1710 = vpack.c.b16 %v1386, %v1382
    %v1711 = vpack.c.b16 %v1391, %v1387
    %v1712 = vpack.c.b16 %v1392, %v1388
    %v1713 = vpack.c.b16 %v1393, %v1389
    %v1714 = vpack.c.b16 %v1394, %v1390
    %v1715 = vpack.c.b16 %v1399, %v1395
    %v1716 = vpack.c.b16 %v1400, %v1396
    %v1717 = vpack.c.b16 %v1401, %v1397
    %v1718 = vpack.c.b16 %v1402, %v1398
    %v1719 = vpack.c.b16 %v1407, %v1403
    %v1720 = vpack.c.b16 %v1408, %v1404
    %v1721 = vpack.c.b16 %v1409, %v1405
    %v1722 = vpack.c.b16 %v1410, %v1406
    %v1723 = vpack.c.b16 %v1415, %v1411
    %v1724 = vpack.c.b16 %v1416, %v1412
    %v1725 = vpack.c.b16 %v1417, %v1413
    %v1726 = vpack.c.b16 %v1418, %v1414
    %v1727 = vpack.c.b16 %v1423, %v1419
    %v1728 = vpack.c.b16 %v1424, %v1420
    %v1729 = vpack.c.b16 %v1425, %v1421
    %v1730 = vpack.c.b16 %v1426, %v1422
    %v1731 = vpack.c.b16 %v1431, %v1427
    %v1732 = vpack.c.b16 %v1432, %v1428
    %v1733 = vpack.c.b16 %v1433, %v1429
    %v1734 = vpack.c.b16 %v1434, %v1430
    %vm2035 = vcmask 392192
    %v2037 = vsel %vm2035, %v107, 0
    %2039 = vmatprep.subr.bf16.mxu0 %v1436
    %2040 = vmatpush1.bf16.msra.mxu0 %v1435
    %2041 = vmatprep.subr.bf16.mxu0 %v1440
    %2042 = vmatpush1.bf16.msra.mxu0 %v1439
    %2043 = vmatprep.subr.bf16.mxu0 %v1444
    %2044 = vmatpush1.bf16.msra.mxu0 %v1443
    %2045 = vmatprep.subr.bf16.mxu0 %v1448
    %2046 = vmatpush1.bf16.msra.mxu0 %v1447
    %2047 = vmatprep.subr.bf16.mxu0 %v1452
    %2048 = vmatpush1.bf16.msra.mxu0 %v1451
    %2049 = vmatprep.subr.bf16.mxu0 %v1456
    %2050 = vmatpush1.bf16.msra.mxu0 %v1455
    %2051 = vmatprep.subr.bf16.mxu0 %v1460
    %2052 = vmatpush1.bf16.msra.mxu0 %v1459
    %2053 = vmatprep.subr.bf16.mxu0 %v1464
    %2054 = vmatpush1.bf16.msra.mxu0 %v1463
    %2055 = vmatprep.subr.bf16.mxu0 %v1468
    %2056 = vmatpush1.bf16.msra.mxu0 %v1467
    %2057 = vmatprep.subr.bf16.mxu0 %v1472
    %2058 = vmatpush1.bf16.msra.mxu0 %v1471
    %2059 = vmatprep.subr.bf16.mxu0 %v1476
    %2060 = vmatpush1.bf16.msra.mxu0 %v1475
    %2061 = vmatprep.subr.bf16.mxu0 %v1480
    %2062 = vmatpush1.bf16.msra.mxu0 %v1479
    %2063 = vmatprep.subr.bf16.mxu0 %v1484
    %2064 = vmatpush1.bf16.msra.mxu0 %v1483
    %2065 = vmatprep.subr.bf16.mxu0 %v1488
    %2066 = vmatpush1.bf16.msra.mxu0 %v1487
    %2067 = vmatprep.subr.bf16.mxu0 %v1492
    %2068 = vmatpush1.bf16.msra.mxu0 %v1491
    %2069 = vmatprep.subr.bf16.mxu0 %v1496
    %2070 = vmatpush1.bf16.msra.mxu0 %v1495
    %2071 = vmatprep.mubr.bf16.mxu0 %v99
    %2072 = vmatmul.mubr.bf16.gmra.mrb[0].mxu0 %v98
    %v2073 = vpop.f32.mrb[0].mxu0
    %v2074 = vadd.f32 %v488, %v2073
    %v2075 = vpop.f32.mrb[0].mxu0
    %v2076 = vadd.f32 %v490, %v2075
    %v2077 = vpop.f32.mrb[0].mxu0
    %v2078 = vpop.f32.mrb[0].mxu0
    %2079 = vdwg.mxu0
    %2080 = vmatprep.subr.bf16.mxu0 %v1500
    %2081 = vmatpush1.bf16.msra.mxu0 %v1499
    %2082 = vmatprep.subr.bf16.mxu0 %v1504
    %2083 = vmatpush1.bf16.msra.mxu0 %v1503
    %2084 = vmatprep.subr.bf16.mxu0 %v1508
    %2085 = vmatpush1.bf16.msra.mxu0 %v1507
    %2086 = vmatprep.subr.bf16.mxu0 %v1512
    %2087 = vmatpush1.bf16.msra.mxu0 %v1511
    %2088 = vmatprep.subr.bf16.mxu0 %v1516
    %2089 = vmatpush1.bf16.msra.mxu0 %v1515
    %2090 = vmatprep.subr.bf16.mxu0 %v1520
    %2091 = vmatpush1.bf16.msra.mxu0 %v1519
    %2092 = vmatprep.subr.bf16.mxu0 %v1524
    %2093 = vmatpush1.bf16.msra.mxu0 %v1523
    %2094 = vmatprep.subr.bf16.mxu0 %v1528
    %2095 = vmatpush1.bf16.msra.mxu0 %v1527
    %2096 = vmatprep.subr.bf16.mxu0 %v1532
    %2097 = vmatpush1.bf16.msra.mxu0 %v1531
    %2098 = vmatprep.subr.bf16.mxu0 %v1536
    %2099 = vmatpush1.bf16.msra.mxu0 %v1535
    %2100 = vmatprep.subr.bf16.mxu0 %v1540
    %2101 = vmatpush1.bf16.msra.mxu0 %v1539
    %2102 = vmatprep.subr.bf16.mxu0 %v1544
    %2103 = vmatpush1.bf16.msra.mxu0 %v1543
    %2104 = vmatprep.subr.bf16.mxu0 %v1548
    %2105 = vmatpush1.bf16.msra.mxu0 %v1547
    %2106 = vmatprep.subr.bf16.mxu0 %v1552
    %2107 = vmatpush1.bf16.msra.mxu0 %v1551
    %2108 = vmatprep.subr.bf16.mxu0 %v1556
    %2109 = vmatpush1.bf16.msra.mxu0 %v1555
    %2110 = vmatprep.subr.bf16.mxu0 %v1560
    %2111 = vmatpush1.bf16.msra.mxu0 %v1559
    %2112 = vmatprep.mubr.bf16.mxu0 %v101
    %2113 = vmatmul.mubr.bf16.gmra.mrb[0].mxu0 %v100
    %v2114 = vpop.f32.mrb[0].mxu0
    %v2115 = vadd.f32 %v2074, %v2114
    %v2116 = vpop.f32.mrb[0].mxu0
    %v2117 = vadd.f32 %v2076, %v2116
    %v2118 = vpop.f32.mrb[0].mxu0
    %v2119 = vpop.f32.mrb[0].mxu0
    %2120 = vdwg.mxu0
    %2121 = vmatprep.subr.bf16.mxu0 %v1564
    %2122 = vmatpush1.bf16.msra.mxu0 %v1563
    %2123 = vmatprep.subr.bf16.mxu0 %v1568
    %2124 = vmatpush1.bf16.msra.mxu0 %v1567
    %2125 = vmatprep.subr.bf16.mxu0 %v1572
    %2126 = vmatpush1.bf16.msra.mxu0 %v1571
    %2127 = vmatprep.subr.bf16.mxu0 %v1576
    %2128 = vmatpush1.bf16.msra.mxu0 %v1575
    %2129 = vmatprep.subr.bf16.mxu0 %v1580
    %2130 = vmatpush1.bf16.msra.mxu0 %v1579
    %2131 = vmatprep.subr.bf16.mxu0 %v1584
    %2132 = vmatpush1.bf16.msra.mxu0 %v1583
    %2133 = vmatprep.subr.bf16.mxu0 %v1588
    %2134 = vmatpush1.bf16.msra.mxu0 %v1587
    %2135 = vmatprep.subr.bf16.mxu0 %v1592
    %2136 = vmatpush1.bf16.msra.mxu0 %v1591
    %2137 = vmatprep.subr.bf16.mxu0 %v1596
    %2138 = vmatpush1.bf16.msra.mxu0 %v1595
    %2139 = vmatprep.subr.bf16.mxu0 %v1600
    %2140 = vmatpush1.bf16.msra.mxu0 %v1599
    %2141 = vmatprep.subr.bf16.mxu0 %v1604
    %2142 = vmatpush1.bf16.msra.mxu0 %v1603
    %2143 = vmatprep.subr.bf16.mxu0 %v1608
    %2144 = vmatpush1.bf16.msra.mxu0 %v1607
    %2145 = vmatprep.subr.bf16.mxu0 %v1612
    %2146 = vmatpush1.bf16.msra.mxu0 %v1611
    %2147 = vmatprep.subr.bf16.mxu0 %v1616
    %2148 = vmatpush1.bf16.msra.mxu0 %v1615
    %2149 = vmatprep.subr.bf16.mxu0 %v1620
    %2150 = vmatpush1.bf16.msra.mxu0 %v1619
    %2151 = vmatprep.subr.bf16.mxu0 %v1624
    %2152 = vmatpush1.bf16.msra.mxu0 %v1623
    %2153 = vmatprep.mubr.bf16.mxu0 %v103
    %2154 = vmatmul.mubr.bf16.gmra.mrb[0].mxu0 %v102
    %v2155 = vpop.f32.mrb[0].mxu0
    %v2156 = vadd.f32 %v2115, %v2155
    %v2157 = vpop.f32.mrb[0].mxu0
    %v2158 = vadd.f32 %v2117, %v2157
    %v2159 = vpop.f32.mrb[0].mxu0
    %v2160 = vpop.f32.mrb[0].mxu0
    %2161 = vdwg.mxu0
    %2162 = vmatprep.subr.bf16.mxu0 %v1628
    %2163 = vmatpush1.bf16.msra.mxu0 %v1627
    %2164 = vmatprep.subr.bf16.mxu0 %v1632
    %2165 = vmatpush1.bf16.msra.mxu0 %v1631
    %2166 = vmatprep.subr.bf16.mxu0 %v1636
    %2167 = vmatpush1.bf16.msra.mxu0 %v1635
    %2168 = vmatprep.subr.bf16.mxu0 %v1640
    %2169 = vmatpush1.bf16.msra.mxu0 %v1639
    %2170 = vmatprep.subr.bf16.mxu0 %v1644
    %2171 = vmatpush1.bf16.msra.mxu0 %v1643
    %2172 = vmatprep.subr.bf16.mxu0 %v1648
    %2173 = vmatpush1.bf16.msra.mxu0 %v1647
    %2174 = vmatprep.subr.bf16.mxu0 %v1652
    %2175 = vmatpush1.bf16.msra.mxu0 %v1651
    %2176 = vmatprep.subr.bf16.mxu0 %v1656
    %2177 = vmatpush1.bf16.msra.mxu0 %v1655
    %2178 = vmatprep.subr.bf16.mxu0 %v1660
    %2179 = vmatpush1.bf16.msra.mxu0 %v1659
    %2180 = vmatprep.subr.bf16.mxu0 %v1664
    %2181 = vmatpush1.bf16.msra.mxu0 %v1663
    %2182 = vmatprep.subr.bf16.mxu0 %v1668
    %2183 = vmatpush1.bf16.msra.mxu0 %v1667
    %2184 = vmatprep.subr.bf16.mxu0 %v1672
    %2185 = vmatpush1.bf16.msra.mxu0 %v1671
    %2186 = vmatprep.subr.bf16.mxu0 %v1676
    %2187 = vmatpush1.bf16.msra.mxu0 %v1675
    %2188 = vmatprep.subr.bf16.mxu0 %v1680
    %2189 = vmatpush1.bf16.msra.mxu0 %v1679
    %2190 = vmatprep.subr.bf16.mxu0 %v1684
    %2191 = vmatpush1.bf16.msra.mxu0 %v1683
    %2192 = vmatprep.subr.bf16.mxu0 %v1688
    %2193 = vmatpush1.bf16.msra.mxu0 %v1687
    %2194 = vmatprep.mubr.bf16.mxu0 %v105
    %2195 = vmatmul.mubr.bf16.gmra.mrb[0].mxu0 %v104
    %v2196 = vpop.f32.mrb[0].mxu0
    %v2197 = vadd.f32 %v2156, %v2196
    %v2198 = vpop.f32.mrb[0].mxu0
    %v2199 = vadd.f32 %v2158, %v2198
    %v2200 = vpop.f32.mrb[0].mxu0
    %v2201 = vpop.f32.mrb[0].mxu0
    %2202 = vdwg.mxu0
    %2203 = vmatprep.subr.bf16.mxu0 %v1692
    %2204 = vmatpush1.bf16.msra.mxu0 %v1691
    %2205 = vmatprep.subr.bf16.mxu0 %v1696
    %2206 = vmatpush1.bf16.msra.mxu0 %v1695
    %2207 = vmatprep.subr.bf16.mxu0 %v1700
    %2208 = vmatpush1.bf16.msra.mxu0 %v1699
    %2209 = vmatprep.subr.bf16.mxu0 %v1704
    %2210 = vmatpush1.bf16.msra.mxu0 %v1703
    %2211 = vmatprep.subr.bf16.mxu0 %v1708
    %2212 = vmatpush1.bf16.msra.mxu0 %v1707
    %2213 = vmatprep.subr.bf16.mxu0 %v1712
    %2214 = vmatpush1.bf16.msra.mxu0 %v1711
    %2215 = vmatprep.subr.bf16.mxu0 %v1716
    %2216 = vmatpush1.bf16.msra.mxu0 %v1715
    %2217 = vmatprep.subr.bf16.mxu0 %v1720
    %2218 = vmatpush1.bf16.msra.mxu0 %v1719
    %2219 = vmatprep.subr.bf16.mxu0 %v1724
    %2220 = vmatpush1.bf16.msra.mxu0 %v1723
    %2221 = vmatprep.subr.bf16.mxu0 %v1728
    %2222 = vmatpush1.bf16.msra.mxu0 %v1727
    %2223 = vmatprep.subr.bf16.mxu0 %v1732
    %2224 = vmatpush1.bf16.msra.mxu0 %v1731
    %2225 = vmatprep.subr.bf16.mxu0 0
    %2226 = vmatpush1.bf16.msra.mxu0 0
    %2227 = vmatprep.subr.bf16.mxu0 0
    %2228 = vmatpush1.bf16.msra.mxu0 0
    %2229 = vmatprep.subr.bf16.mxu0 0
    %2230 = vmatpush1.bf16.msra.mxu0 0
    %2231 = vmatprep.subr.bf16.mxu0 0
    %2232 = vmatpush1.bf16.msra.mxu0 0
    %2233 = vmatprep.subr.bf16.mxu0 0
    %2234 = vmatpush1.bf16.msra.mxu0 0
    %2235 = vmatprep.mubr.bf16.mxu0 %v2037
    %2236 = vmatmul.mubr.bf16.gmra.mrb[0].mxu0 %v106
    %v2237 = vpop.f32.mrb[0].mxu0
    %v2238 = vadd.f32 %v2197, %v2237
    %v2239 = vpop.f32.mrb[0].mxu0
    %v2240 = vadd.f32 %v2199, %v2239
    %v2241 = vpop.f32.mrb[0].mxu0
    %v2242 = vpop.f32.mrb[0].mxu0
    %2243 = vdwg.mxu0
    %2244 = vmatprep.subr.bf16.mxu0 %v1438
    %2245 = vmatpush1.bf16.msra.mxu0 %v1437
    %2246 = vmatprep.subr.bf16.mxu0 %v1442
    %2247 = vmatpush1.bf16.msra.mxu0 %v1441
    %2248 = vmatprep.subr.bf16.mxu0 %v1446
    %2249 = vmatpush1.bf16.msra.mxu0 %v1445
    %2250 = vmatprep.subr.bf16.mxu0 %v1450
    %2251 = vmatpush1.bf16.msra.mxu0 %v1449
    %2252 = vmatprep.subr.bf16.mxu0 %v1454
    %2253 = vmatpush1.bf16.msra.mxu0 %v1453
    %2254 = vmatprep.subr.bf16.mxu0 %v1458
    %2255 = vmatpush1.bf16.msra.mxu0 %v1457
    %2256 = vmatprep.subr.bf16.mxu0 %v1462
    %2257 = vmatpush1.bf16.msra.mxu0 %v1461
    %2258 = vmatprep.subr.bf16.mxu0 %v1466
    %2259 = vmatpush1.bf16.msra.mxu0 %v1465
    %2260 = vmatprep.subr.bf16.mxu0 %v1470
    %2261 = vmatpush1.bf16.msra.mxu0 %v1469
    %2262 = vmatprep.subr.bf16.mxu0 %v1474
    %2263 = vmatpush1.bf16.msra.mxu0 %v1473
    %2264 = vmatprep.subr.bf16.mxu0 %v1478
    %2265 = vmatpush1.bf16.msra.mxu0 %v1477
    %2266 = vmatprep.subr.bf16.mxu0 %v1482
    %2267 = vmatpush1.bf16.msra.mxu0 %v1481
    %2268 = vmatprep.subr.bf16.mxu0 %v1486
    %2269 = vmatpush1.bf16.msra.mxu0 %v1485
    %2270 = vmatprep.subr.bf16.mxu0 %v1490
    %2271 = vmatpush1.bf16.msra.mxu0 %v1489
    %2272 = vmatprep.subr.bf16.mxu0 %v1494
    %2273 = vmatpush1.bf16.msra.mxu0 %v1493
    %2274 = vmatprep.subr.bf16.mxu0 %v1498
    %2275 = vmatpush1.bf16.msra.mxu0 %v1497
    %2276 = vmatprep.mubr.bf16.mxu0 %v99
    %2277 = vmatmul.mubr.bf16.gmra.mrb[0].mxu0 %v98
    %v2278 = vpop.f32.mrb[0].mxu0
    %v2279 = vadd.f32 %v529, %v2278
    %v2280 = vpop.f32.mrb[0].mxu0
    %v2281 = vadd.f32 %v531, %v2280
    %v2282 = vpop.f32.mrb[0].mxu0
    %v2283 = vpop.f32.mrb[0].mxu0
    %2284 = vdwg.mxu0
    %2285 = vmatprep.subr.bf16.mxu0 %v1502
    %2286 = vmatpush1.bf16.msra.mxu0 %v1501
    %2287 = vmatprep.subr.bf16.mxu0 %v1506
    %2288 = vmatpush1.bf16.msra.mxu0 %v1505
    %2289 = vmatprep.subr.bf16.mxu0 %v1510
    %2290 = vmatpush1.bf16.msra.mxu0 %v1509
    %2291 = vmatprep.subr.bf16.mxu0 %v1514
    %2292 = vmatpush1.bf16.msra.mxu0 %v1513
    %2293 = vmatprep.subr.bf16.mxu0 %v1518
    %2294 = vmatpush1.bf16.msra.mxu0 %v1517
    %2295 = vmatprep.subr.bf16.mxu0 %v1522
    %2296 = vmatpush1.bf16.msra.mxu0 %v1521
    %2297 = vmatprep.subr.bf16.mxu0 %v1526
    %2298 = vmatpush1.bf16.msra.mxu0 %v1525
    %2299 = vmatprep.subr.bf16.mxu0 %v1530
    %2300 = vmatpush1.bf16.msra.mxu0 %v1529
    %2301 = vmatprep.subr.bf16.mxu0 %v1534
    %2302 = vmatpush1.bf16.msra.mxu0 %v1533
    %2303 = vmatprep.subr.bf16.mxu0 %v1538
    %2304 = vmatpush1.bf16.msra.mxu0 %v1537
    %2305 = vmatprep.subr.bf16.mxu0 %v1542
    %2306 = vmatpush1.bf16.msra.mxu0 %v1541
    %2307 = vmatprep.subr.bf16.mxu0 %v1546
    %2308 = vmatpush1.bf16.msra.mxu0 %v1545
    %2309 = vmatprep.subr.bf16.mxu0 %v1550
    %2310 = vmatpush1.bf16.msra.mxu0 %v1549
    %2311 = vmatprep.subr.bf16.mxu0 %v1554
    %2312 = vmatpush1.bf16.msra.mxu0 %v1553
    %2313 = vmatprep.subr.bf16.mxu0 %v1558
    %2314 = vmatpush1.bf16.msra.mxu0 %v1557
    %2315 = vmatprep.subr.bf16.mxu0 %v1562
    %2316 = vmatpush1.bf16.msra.mxu0 %v1561
    %2317 = vmatprep.mubr.bf16.mxu0 %v101
    %2318 = vmatmul.mubr.bf16.gmra.mrb[0].mxu0 %v100
    %v2319 = vpop.f32.mrb[0].mxu0
    %v2320 = vadd.f32 %v2279, %v2319
    %v2321 = vpop.f32.mrb[0].mxu0
    %v2322 = vadd.f32 %v2281, %v2321
    %v2323 = vpop.f32.mrb[0].mxu0
    %v2324 = vpop.f32.mrb[0].mxu0
    %2325 = vdwg.mxu0
    %2326 = vmatprep.subr.bf16.mxu0 %v1566
    %2327 = vmatpush1.bf16.msra.mxu0 %v1565
    %2328 = vmatprep.subr.bf16.mxu0 %v1570
    %2329 = vmatpush1.bf16.msra.mxu0 %v1569
    %2330 = vmatprep.subr.bf16.mxu0 %v1574
    %2331 = vmatpush1.bf16.msra.mxu0 %v1573
    %2332 = vmatprep.subr.bf16.mxu0 %v1578
    %2333 = vmatpush1.bf16.msra.mxu0 %v1577
    %2334 = vmatprep.subr.bf16.mxu0 %v1582
    %2335 = vmatpush1.bf16.msra.mxu0 %v1581
    %2336 = vmatprep.subr.bf16.mxu0 %v1586
    %2337 = vmatpush1.bf16.msra.mxu0 %v1585
    %2338 = vmatprep.subr.bf16.mxu0 %v1590
    %2339 = vmatpush1.bf16.msra.mxu0 %v1589
    %2340 = vmatprep.subr.bf16.mxu0 %v1594
    %2341 = vmatpush1.bf16.msra.mxu0 %v1593
    %2342 = vmatprep.subr.bf16.mxu0 %v1598
    %2343 = vmatpush1.bf16.msra.mxu0 %v1597
    %2344 = vmatprep.subr.bf16.mxu0 %v1602
    %2345 = vmatpush1.bf16.msra.mxu0 %v1601
    %2346 = vmatprep.subr.bf16.mxu0 %v1606
    %2347 = vmatpush1.bf16.msra.mxu0 %v1605
    %2348 = vmatprep.subr.bf16.mxu0 %v1610
    %2349 = vmatpush1.bf16.msra.mxu0 %v1609
    %2350 = vmatprep.subr.bf16.mxu0 %v1614
    %2351 = vmatpush1.bf16.msra.mxu0 %v1613
    %2352 = vmatprep.subr.bf16.mxu0 %v1618
    %2353 = vmatpush1.bf16.msra.mxu0 %v1617
    %2354 = vmatprep.subr.bf16.mxu0 %v1622
    %2355 = vmatpush1.bf16.msra.mxu0 %v1621
    %2356 = vmatprep.subr.bf16.mxu0 %v1626
    %2357 = vmatpush1.bf16.msra.mxu0 %v1625
    %2358 = vmatprep.mubr.bf16.mxu0 %v103
    %2359 = vmatmul.mubr.bf16.gmra.mrb[0].mxu0 %v102
    %v2360 = vpop.f32.mrb[0].mxu0
    %v2361 = vadd.f32 %v2320, %v2360
    %v2362 = vpop.f32.mrb[0].mxu0
    %v2363 = vadd.f32 %v2322, %v2362
    %v2364 = vpop.f32.mrb[0].mxu0
    %v2365 = vpop.f32.mrb[0].mxu0
    %2366 = vdwg.mxu0
    %2367 = vmatprep.subr.bf16.mxu0 %v1630
    %2368 = vmatpush1.bf16.msra.mxu0 %v1629
    %2369 = vmatprep.subr.bf16.mxu0 %v1634
    %2370 = vmatpush1.bf16.msra.mxu0 %v1633
    %2371 = vmatprep.subr.bf16.mxu0 %v1638
    %2372 = vmatpush1.bf16.msra.mxu0 %v1637
    %2373 = vmatprep.subr.bf16.mxu0 %v1642
    %2374 = vmatpush1.bf16.msra.mxu0 %v1641
    %2375 = vmatprep.subr.bf16.mxu0 %v1646
    %2376 = vmatpush1.bf16.msra.mxu0 %v1645
    %2377 = vmatprep.subr.bf16.mxu0 %v1650
    %2378 = vmatpush1.bf16.msra.mxu0 %v1649
    %2379 = vmatprep.subr.bf16.mxu0 %v1654
    %2380 = vmatpush1.bf16.msra.mxu0 %v1653
    %2381 = vmatprep.subr.bf16.mxu0 %v1658
    %2382 = vmatpush1.bf16.msra.mxu0 %v1657
    %2383 = vmatprep.subr.bf16.mxu0 %v1662
    %2384 = vmatpush1.bf16.msra.mxu0 %v1661
    %2385 = vmatprep.subr.bf16.mxu0 %v1666
    %2386 = vmatpush1.bf16.msra.mxu0 %v1665
    %2387 = vmatprep.subr.bf16.mxu0 %v1670
    %2388 = vmatpush1.bf16.msra.mxu0 %v1669
    %2389 = vmatprep.subr.bf16.mxu0 %v1674
    %2390 = vmatpush1.bf16.msra.mxu0 %v1673
    %2391 = vmatprep.subr.bf16.mxu0 %v1678
    %2392 = vmatpush1.bf16.msra.mxu0 %v1677
    %2393 = vmatprep.subr.bf16.mxu0 %v1682
    %2394 = vmatpush1.bf16.msra.mxu0 %v1681
    %2395 = vmatprep.subr.bf16.mxu0 %v1686
    %2396 = vmatpush1.bf16.msra.mxu0 %v1685
    %2397 = vmatprep.subr.bf16.mxu0 %v1690
    %2398 = vmatpush1.bf16.msra.mxu0 %v1689
    %2399 = vmatprep.mubr.bf16.mxu0 %v105
    %2400 = vmatmul.mubr.bf16.gmra.mrb[0].mxu0 %v104
    %v2401 = vpop.f32.mrb[0].mxu0
    %v2402 = vadd.f32 %v2361, %v2401
    %v2403 = vpop.f32.mrb[0].mxu0
    %v2404 = vadd.f32 %v2363, %v2403
    %v2405 = vpop.f32.mrb[0].mxu0
    %v2406 = vpop.f32.mrb[0].mxu0
    %2407 = vdwg.mxu0
    %2408 = vmatprep.subr.bf16.mxu0 %v1694
    %2409 = vmatpush1.bf16.msra.mxu0 %v1693
    %2410 = vmatprep.subr.bf16.mxu0 %v1698
    %2411 = vmatpush1.bf16.msra.mxu0 %v1697
    %2412 = vmatprep.subr.bf16.mxu0 %v1702
    %2413 = vmatpush1.bf16.msra.mxu0 %v1701
    %2414 = vmatprep.subr.bf16.mxu0 %v1706
    %2415 = vmatpush1.bf16.msra.mxu0 %v1705
    %2416 = vmatprep.subr.bf16.mxu0 %v1710
    %2417 = vmatpush1.bf16.msra.mxu0 %v1709
    %2418 = vmatprep.subr.bf16.mxu0 %v1714
    %2419 = vmatpush1.bf16.msra.mxu0 %v1713
    %2420 = vmatprep.subr.bf16.mxu0 %v1718
    %2421 = vmatpush1.bf16.msra.mxu0 %v1717
    %2422 = vmatprep.subr.bf16.mxu0 %v1722
    %2423 = vmatpush1.bf16.msra.mxu0 %v1721
    %2424 = vmatprep.subr.bf16.mxu0 %v1726
    %2425 = vmatpush1.bf16.msra.mxu0 %v1725
    %2426 = vmatprep.subr.bf16.mxu0 %v1730
    %2427 = vmatpush1.bf16.msra.mxu0 %v1729
    %2428 = vmatprep.subr.bf16.mxu0 %v1734
    %2429 = vmatpush1.bf16.msra.mxu0 %v1733
    %2430 = vmatprep.subr.bf16.mxu0 0
    %2431 = vmatpush1.bf16.msra.mxu0 0
    %2432 = vmatprep.subr.bf16.mxu0 0
    %2433 = vmatpush1.bf16.msra.mxu0 0
    %2434 = vmatprep.subr.bf16.mxu0 0
    %2435 = vmatpush1.bf16.msra.mxu0 0
    %2436 = vmatprep.subr.bf16.mxu0 0
    %2437 = vmatpush1.bf16.msra.mxu0 0
    %2438 = vmatprep.subr.bf16.mxu0 0
    %2439 = vmatpush1.bf16.msra.mxu0 0
    %2440 = vmatprep.mubr.bf16.mxu0 %v2037
    %2441 = vmatmul.mubr.bf16.gmra.mrb[0].mxu0 %v106
    %v2442 = vpop.f32.mrb[0].mxu0
    %v2443 = vadd.f32 %v2402, %v2442
    %v2444 = vpop.f32.mrb[0].mxu0
    %v2445 = vadd.f32 %v2404, %v2444
    %v2446 = vpop.f32.mrb[0].mxu0
    %v2447 = vpop.f32.mrb[0].mxu0
    %2448 = vdwg.mxu0
    %v2449 = vld [vmem:[#allocation8] sm:$0xf]
    %v2451 = vlaneseq
    %v2452 = vshrl.u32 %v2451, 7
    %v2453 = vsub.s32 0, %v2452
    %v2454 = vrot.slane %v2449, %v2453
    %v2455 = vlaneseq
    %v2456 = vshrl.u32 %v2455, 7
    %v2457 = vsub.s32 1, %v2456
    %v2458 = vrot.slane %v2449, %v2457
    %v2459 = vlaneseq
    %v2460 = vshrl.u32 %v2459, 7
    %v2461 = vsub.s32 2, %v2460
    %v2462 = vrot.slane %v2449, %v2461
    %v2463 = vlaneseq
    %v2464 = vshrl.u32 %v2463, 7
    %v2465 = vsub.s32 3, %v2464
    %v2466 = vrot.slane %v2449, %v2465
    %v2471 = vadd.f32 %v2238, %v2454
    %v2472 = vadd.f32 %v2240, %v2458
    %v2473 = vadd.f32 %v2443, %v2462
    %v2474 = vadd.f32 %v2445, %v2466
    %v2475 = vmax.f32 %v2471, 0.0
    %v2476 = vmax.f32 %v2472, 0.0
    %v2477 = vmax.f32 %v2473, 0.0
    %v2478 = vmax.f32 %v2474, 0.0
    %v2479 = vpack.c.bf16 %v2475, %v2475
    %v2480 = vpack.c.bf16 %v2476, %v2476
    %v2481 = vpack.c.bf16 %v2477, %v2477
    %v2482 = vpack.c.bf16 %v2478, %v2478
    %v2483 = vld [vmem:[#allocation10] sm:$0xf]
    %v2486 = vunpack.c.l.s4 1966171168
    %v2487 = vunpack.c.0.s8 %v2486
    %v2488 = vlaneseq
    %v2489 = vshrl.u32 %v2488, 7
    %v2490 = vsub.s32 %v2487, %v2489
    %v2491 = vrot.slane %v2483, %v2490
    %v2492 = vcombine.high %v2491, %v2491
    %v2494 = vunpack.c.l.s4 1966171168
    %v2495 = vunpack.c.0.s8 %v2494
    %v2496 = vlaneseq
    %v2497 = vshrl.u32 %v2496, 7
    %v2498 = vsub.s32 %v2495, %v2497
    %v2499 = vrot.slane %v2491, %v2498
    %v2501 = vunpack.c.l.s4 1966171168
    %v2502 = vunpack.c.0.s8 %v2501
    %v2503 = vlaneseq
    %v2504 = vshrl.u32 %v2503, 7
    %v2505 = vsub.s32 %v2502, %v2504
    %v2506 = vrot.slane %v2492, %v2505
    %v2507 = vcombine.high %v2499, %v2499
    %v2508 = vcombine.high %v2506, %v2506
    %v2510 = vpack.i.b16 %v2499, %v2499
    %v2512 = vlaneseq
    %v2513 = vshrl.u32 %v2512, 7
    %v2514 = vsub.s32 0, %v2513
    %v2515 = vrot.slane %v2510, %v2514
    %v2517 = vpack.i.b16 %v2506, %v2506
    %v2519 = vlaneseq
    %v2520 = vshrl.u32 %v2519, 7
    %v2521 = vsub.s32 0, %v2520
    %v2522 = vrot.slane %v2517, %v2521
    %v2524 = vpack.i.b16 %v2507, %v2507
    %v2526 = vlaneseq
    %v2527 = vshrl.u32 %v2526, 7
    %v2528 = vsub.s32 0, %v2527
    %v2529 = vrot.slane %v2524, %v2528
    %v2531 = vpack.i.b16 %v2508, %v2508
    %v2533 = vlaneseq
    %v2534 = vshrl.u32 %v2533, 7
    %v2535 = vsub.s32 0, %v2534
    %v2536 = vrot.slane %v2531, %v2535
    %v2537 = vmul.bf16 %v2479, %v2515
    %v2538 = vmul.bf16 %v2480, %v2522
    %v2539 = vmul.bf16 %v2481, %v2529
    %v2540 = vmul.bf16 %v2482, %v2536
    %v2541 = vunpack.c.l.bf16 %v2537
    %v2542 = vunpack.c.l.bf16 %v2538
    %v2543 = vunpack.c.l.bf16 %v2539
    %v2544 = vunpack.c.l.bf16 %v2540
    %v2545 = vadd.f32 %v2541, %v2542
    %v2546 = vadd.f32 %v2545, %v2543
    %v2547 = vadd.f32 %v2546, %v2544
    %2548 = vadd.xlane.f32.xlu0 %v2547
    %v2549 = vpop.xlane.xlu0 %2548
    %s2550 = sld [smem:[#allocation2]]
    %v2551 = vstv %s2550
    %v2552 = vadd.f32 %v2549, %v2551
    %vm2553 = vcmask 7168
    %2554 = vst.msk [vmem:[%s7] sm:$0xff] %vm2553, %v2552
    // Predicated region
    $region50: #{tpu_custom_call.1} parent=1 // pred_check
      _
    $region51: #{tpu_custom_call.1} parent=1 // pred_check_branch
      %2556 = sbr.rel (0) target = $region53
    $region52: #{tpu_custom_call.1} parent=1 // pred_region
      _
    $region53: #{tpu_custom_call.1} parent=1 // pred_fallthru
      _
    // Predicated region
    $region54: #{tpu_custom_call.1} parent=1 // pred_check
      _
    $region55: #{tpu_custom_call.1} parent=1 // pred_check_branch
      %2558 = sbr.rel (0) target = $region57
    $region56: #{tpu_custom_call.1} parent=1 // pred_region
      _
    $region57: #{tpu_custom_call.1} parent=1 // pred_fallthru
      _
    %2559 = vsyncpa [#allocation4], 1
    %2560 = vsyncpa [#allocation6], 1
    %2561 = vsyncpa [#allocation9], 1

</llo_original>
